<compile_context>
chip_gen: v7x
topology: tpu7x:2x2x1
jax: 0.10.0
libtpu: 0.0.40
codegen_flags: <defaults>
</compile_context>

<pallas_src>
import functools

import jax
import jax.numpy as jnp
from jax import lax
from jax.experimental import pallas as pl
from jax.experimental.pallas import tpu as pltpu


def mhsa_kernel(x_ref, w_ref, b_ref, pos_ref, lnw_ref, lnb_ref, o_ref,
                out_sc, sum_sc, ssq_sc, *, heads, eps, exp_dtype):
    h = pl.program_id(1)
    x = x_ref[0]                                    # (C, N) f32
    C, N = x.shape
    d = C // heads

    @pl.when(h == 0)
    def _():
        sum_sc[...] = jnp.zeros_like(sum_sc)
        ssq_sc[...] = jnp.zeros_like(ssq_sc)

    # Per-head QKV projection: rows [q_h; k_h; v_h] = w_h @ x + b_h.
    # bf16 MXU operands, f32 accumulation, bias added in f32.
    xb = x.astype(jnp.bfloat16)
    proj = jnp.dot(w_ref[0], xb,
                   preferred_element_type=jnp.float32) + b_ref[0]    # (3d, N) f32
    # Cast ONCE; every MXU consumer below slices these bf16 slabs.
    qk_bf = proj[:2 * d, :].astype(jnp.bfloat16)    # (2d, N): rows [q_h; k_h]
    v_bf = proj[2 * d:, :].astype(jnp.bfloat16)     # (d, N)

    # Fused energy: content-position + content-content in one K = 2d matmul:
    #   energy[n, m] = sum_d pos_h[d,n]*q_h[d,m] + sum_d q_h[d,n]*k_h[d,m]
    # Expressed as a TN dot_general on bf16 operands (pos arrives bf16 from the
    # wrapper); no explicit f32 transpose/concat on the hot path.
    lhs = jnp.concatenate([pos_ref[0], qk_bf[:d, :]], axis=0)        # (2d, N) bf16
    energy = lax.dot_general(lhs, qk_bf,
                             dimension_numbers=(((0,), (0,)), ((), ())),
                             preferred_element_type=jnp.float32)     # (N, N) f32

    # Softmax over keys. Max and row-sum accumulation stay in f32; exp runs in
    # exp_dtype (bf16 on v6e/v7x, f32 on v5e). Attention weights are produced
    # directly in bf16 to halve the (N, N) store/reload traffic.
    m = jnp.max(energy, axis=-1, keepdims=True)
    e = jnp.exp((energy - m).astype(exp_dtype))
    l = jnp.sum(e, axis=-1, keepdims=True, dtype=jnp.float32)
    inv = pl.reciprocal(l, approx=True)                              # EUP
    attn = (e * inv.astype(e.dtype)).astype(jnp.bfloat16)            # (N, N) bf16

    # out_h = v_h @ attn^T without materializing attn^T (NT dot_general).
    o_h = lax.dot_general(v_bf, attn,
                          dimension_numbers=(((1,), (1,)), ((), ())),
                          preferred_element_type=jnp.float32)        # (d, N) f32
    row = pl.multiple_of(h * d, d)
    out_sc[pl.ds(row, d), :] = o_h

    # LayerNorm partial statistics accumulated while o_h is still in vregs
    # (avoids a second full read of the (C, N) slab for the statistics pass).
    sum_sc[...] += jnp.sum(o_h, keepdims=True)
    ssq_sc[...] += jnp.sum(o_h * o_h, keepdims=True)

    @pl.when(h == pl.num_programs(1) - 1)
    def _():
        # Single-pass variance E[x^2] - mean^2 in f32 over C*N elements; the
        # head outputs are O(1) and near zero-mean, so cancellation is benign.
        out = out_sc[...]
        inv_n = 1.0 / (C * N)
        mean = sum_sc[...] * inv_n                   # (1, 1)
        var = ssq_sc[...] * inv_n - mean * mean      # (1, 1)
        normed = (out - mean) * lax.rsqrt(var + eps)
        o_ref[0] = (normed * lnw_ref[...] + lnb_ref[...] + x).astype(o_ref.dtype)


def _default_softmax_dtype():
    """bf16 exp on chips with a bf16 VPU/EUP (v6e/v7x); f32 on v5e and older."""
    try:
        kind = jax.devices()[0].device_kind.lower()
    except Exception:
        return jnp.float32
    if any(t in kind for t in ("v2", "v3", "v4", "v5")):
        return jnp.float32
    return jnp.bfloat16


def mhsa_forward(x, params, *, heads, eps=1e-5, softmax_dtype=None):
    B, C, W, H = x.shape
    N = W * H
    d = C // heads
    wq, bq, wk, bk, wv, bv, rel_h, rel_w, lnw, lnb = params
    if softmax_dtype is None:
        softmax_dtype = _default_softmax_dtype()

    x_flat = x.reshape(B, C, N)

    # Per-head packed projection weights: rows [q_h; k_h; v_h] so one (3d, C)
    # weight block per head / grid step.  Pre-cast to bf16 (halves DMA bytes).
    w_fused = jnp.concatenate(
        [wq.reshape(heads, d, C), wk.reshape(heads, d, C), wv.reshape(heads, d, C)],
        axis=1).astype(jnp.bfloat16)                                 # (heads, 3d, C)
    b_fused = jnp.concatenate(
        [bq.reshape(heads, d), bk.reshape(heads, d), bv.reshape(heads, d)],
        axis=1).reshape(heads, 3 * d, 1)                             # f32

    # Positional term, lane-dense and pre-cast to bf16: (heads, d, N).
    pos = (rel_h + rel_w).reshape(heads, d, N).astype(jnp.bfloat16)

    lnw2, lnb2 = lnw.reshape(C, N), lnb.reshape(C, N)

    kernel = functools.partial(mhsa_kernel, heads=heads, eps=eps,
                               exp_dtype=softmax_dtype)
    out_flat = pl.pallas_call(
        kernel,
        out_shape=jax.ShapeDtypeStruct((B, C, N), x.dtype),
        grid=(B, heads),
        in_specs=[
            pl.BlockSpec((1, C, N), lambda b, h: (b, 0, 0)),        # x (per batch)
            pl.BlockSpec((1, 3 * d, C), lambda b, h: (h, 0, 0)),    # per-head QKV weight (bf16)
            pl.BlockSpec((1, 3 * d, 1), lambda b, h: (h, 0, 0)),    # per-head QKV bias (f32)
            pl.BlockSpec((1, d, N), lambda b, h: (h, 0, 0)),        # per-head positional term (bf16)
            pl.BlockSpec((C, N), lambda b, h: (0, 0)),              # LayerNorm weight
            pl.BlockSpec((C, N), lambda b, h: (0, 0)),              # LayerNorm bias
        ],
        out_specs=pl.BlockSpec((1, C, N), lambda b, h: (b, 0, 0)),
        scratch_shapes=[
            pltpu.VMEM((C, N), jnp.float32),   # head-output slab (resident over h)
            pltpu.VMEM((1, 1), jnp.float32),   # running sum for LayerNorm
            pltpu.VMEM((1, 1), jnp.float32),   # running sum of squares
        ],
        compiler_params=pltpu.CompilerParams(
            dimension_semantics=("parallel", "arbitrary"),
            vmem_limit_bytes=32 * 1024 * 1024),
    )(x_flat, w_fused, b_fused, pos, lnw2, lnb2)
    return out_flat.reshape(B, C, W, H)


def mhsa_reference(x, params, *, heads, eps=1e-5, mxu_dtype=jnp.float32,
                   softmax_dtype=jnp.float32, attn_dtype=None):
    """Pure-JAX reference mirroring the PyTorch forward.

    mxu_dtype / softmax_dtype / attn_dtype let the test apply the kernel's
    reduced-precision policy (bf16 MXU operands + f32 accumulation, bf16 exp,
    bf16 attention weights) for a tight structural check."""
    wq, bq, wk, bk, wv, bv, rel_h, rel_w, lnw, lnb = params
    B, C, W, H = x.shape
    N = W * H
    d = C // heads
    xf = x.reshape(B, C, N)
    c = lambda a: a.astype(mxu_dtype)
    proj = lambda w, b: (jnp.einsum('oc,bcn->bon', c(w), c(xf),
                                    preferred_element_type=jnp.float32)
                         + b[None, :, None]).reshape(B, heads, d, N)
    q, k, v = proj(wq, bq), proj(wk, bk), proj(wv, bv)
    cc = jnp.einsum('bhdn,bhdm->bhnm', c(q), c(k),
                    preferred_element_type=jnp.float32)
    pos = (rel_h + rel_w).reshape(1, heads, d, N)
    cp = jnp.einsum('zhdn,bhdm->bhnm', c(pos), c(q),
                    preferred_element_type=jnp.float32)
    energy = cc + cp
    m = jnp.max(energy, axis=-1, keepdims=True)
    e = jnp.exp((energy - m).astype(softmax_dtype))
    l = jnp.sum(e, axis=-1, keepdims=True, dtype=jnp.float32)
    attn = e * (1.0 / l).astype(e.dtype)
    if attn_dtype is not None:
        attn = attn.astype(attn_dtype)
    out = jnp.einsum('bhdn,bhmn->bhdm', c(v), c(attn),
                     preferred_element_type=jnp.float32).reshape(B, C, W, H)
    mean = out.mean(axis=(1, 2, 3), keepdims=True)
    var = ((out - mean) ** 2).mean(axis=(1, 2, 3), keepdims=True)
    normed = (out - mean) / jnp.sqrt(var + eps)
    return normed * lnw[None] + lnb[None] + x


def init_params(key, n_dims, width, height, heads):
    d = n_dims // heads
    ks = jax.random.split(key, 8)
    scale = 1.0 / jnp.sqrt(n_dims)
    wq = jax.random.uniform(ks[0], (n_dims, n_dims), jnp.float32, -scale, scale)
    bq = jax.random.uniform(ks[1], (n_dims,), jnp.float32, -scale, scale)
    wk = jax.random.uniform(ks[2], (n_dims, n_dims), jnp.float32, -scale, scale)
    bk = jax.random.uniform(ks[3], (n_dims,), jnp.float32, -scale, scale)
    wv = jax.random.uniform(ks[4], (n_dims, n_dims), jnp.float32, -scale, scale)
    bv = jax.random.uniform(ks[5], (n_dims,), jnp.float32, -scale, scale)
    rel_h = jax.random.normal(ks[6], (1, heads, d, 1, height), jnp.float32)
    rel_w = jax.random.normal(ks[7], (1, heads, d, width, 1), jnp.float32)
    lnw = jnp.ones((n_dims, width, height), jnp.float32)   # LayerNorm default init
    lnb = jnp.zeros((n_dims, width, height), jnp.float32)
    return (wq, bq, wk, bk, wv, bv, rel_h, rel_w, lnw, lnb)


if __name__ == "__main__":
    B, C, W, H, HEADS = 2, 64, 16, 16, 4
    key = jax.random.PRNGKey(0)
    kx, kp = jax.random.split(key)
    x = jax.random.normal(kx, (B, C, W, H), jnp.float32)
    params = init_params(kp, C, W, H, HEADS)

    sm_dtype = _default_softmax_dtype()
    out = mhsa_forward(x, params, heads=HEADS, softmax_dtype=sm_dtype)
    out = jax.block_until_ready(out)
    assert out.shape == (B, C, W, H)

    # Tight check: reference applies the same precision policy as the kernel
    # (bf16 MXU operands + f32 accumulation, same exp dtype, bf16 attention
    # weights).  Remaining differences are the approximate reciprocal,
    # accumulation order, and the single-pass LayerNorm statistics.
    ref_pol = mhsa_reference(x, params, heads=HEADS, mxu_dtype=jnp.bfloat16,
                             softmax_dtype=sm_dtype, attn_dtype=jnp.bfloat16)
    err_pol = float(jnp.max(jnp.abs(out - ref_pol)))
    assert jnp.allclose(out, ref_pol, atol=3e-2, rtol=3e-2), (
        f"max abs diff vs policy-matched reference: {err_pol}")

    # Loose sanity check against a full-f32 reference (bounds the total effect
    # of the intended reduced-precision matmul/softmax policy).
    ref_f32 = mhsa_reference(x, params, heads=HEADS)
    err_f32 = float(jnp.max(jnp.abs(out - ref_f32)))
    assert jnp.allclose(out, ref_f32, atol=2e-1, rtol=2e-1), (
        f"max abs diff vs f32 reference: {err_f32}")

    print("KERNEL_OK")
</pallas_src>

<mosaic_0001>
module attributes {stable_mosaic.version = 11 : i64} {
  func.func @mhsa_kernel(%arg0: i32, %arg1: i32, %arg2: memref<1x64x256xf32, #tpu.memory_space<vmem>>, %arg3: memref<1x48x64xbf16, #tpu.memory_space<vmem>>, %arg4: memref<1x48x1xf32, #tpu.memory_space<vmem>>, %arg5: memref<1x16x256xbf16, #tpu.memory_space<vmem>>, %arg6: memref<64x256xf32, #tpu.memory_space<vmem>>, %arg7: memref<64x256xf32, #tpu.memory_space<vmem>>, %arg8: memref<1x64x256xf32, #tpu.memory_space<vmem>>, %arg9: memref<64x256xf32, #tpu.memory_space<vmem>>, %arg10: memref<1x1xf32, #tpu.memory_space<vmem>>, %arg11: memref<1x1xf32, #tpu.memory_space<vmem>>) attributes {dimension_semantics = [#tpu.dimension_semantics<parallel>, #tpu.dimension_semantics<arbitrary>], iteration_bounds = array<i64: 2, 4>, scalar_prefetch = 0 : i64, scratch_operands = 3 : i64, tpu.core_type = #tpu.core_type<tc>, window_params = [{transform_indices = @transform_0, window_bounds = array<i64: 1, 64, 256>}, {transform_indices = @transform_1, window_bounds = array<i64: 1, 48, 64>}, {transform_indices = @transform_2, window_bounds = array<i64: 1, 48, 1>}, {transform_indices = @transform_3, window_bounds = array<i64: 1, 16, 256>}, {pipeline_mode = #tpu.pipeline_mode<synchronous>, transform_indices = @transform_4, window_bounds = array<i64: 64, 256>}, {pipeline_mode = #tpu.pipeline_mode<synchronous>, transform_indices = @transform_5, window_bounds = array<i64: 64, 256>}, {transform_indices = @transform_6, window_bounds = array<i64: 1, 64, 256>}]} {
    %c0 = arith.constant 0 : index
    %c0_0 = arith.constant 0 : index
    %c0_1 = arith.constant 0 : index
    %0 = vector.load %arg2[%c0, %c0_0, %c0_1] : memref<1x64x256xf32, #tpu.memory_space<vmem>>, vector<1x64x256xf32>
    %1 = vector.shape_cast %0 : vector<1x64x256xf32> to vector<64x256xf32>
    %c0_i32 = arith.constant 0 : i32
    %2 = arith.cmpi eq, %arg1, %c0_i32 : i32
    %3 = arith.extui %2 : i1 to i32
    %c0_i32_2 = arith.constant 0 : i32
    %4 = arith.cmpi ne, %3, %c0_i32_2 : i32
    scf.if %4 {
      %cst_28 = arith.constant 0.000000e+00 : f32
      %60 = vector.broadcast %cst_28 : f32 to vector<1x1xf32>
      %c0_29 = arith.constant 0 : index
      %c0_30 = arith.constant 0 : index
      %61 = vector.load %arg10[%c0_29, %c0_30] : memref<1x1xf32, #tpu.memory_space<vmem>>, vector<1x1xf32>
      tpu.vector_store %arg10[%c0_29, %c0_30], %60 {strides = array<i32>} : memref<1x1xf32, #tpu.memory_space<vmem>>, vector<1x1xf32>,
      %cst_31 = arith.constant 0.000000e+00 : f32
      %62 = vector.broadcast %cst_31 : f32 to vector<1x1xf32>
      %c0_32 = arith.constant 0 : index
      %c0_33 = arith.constant 0 : index
      %63 = vector.load %arg11[%c0_32, %c0_33] : memref<1x1xf32, #tpu.memory_space<vmem>>, vector<1x1xf32>
      tpu.vector_store %arg11[%c0_32, %c0_33], %62 {strides = array<i32>} : memref<1x1xf32, #tpu.memory_space<vmem>>, vector<1x1xf32>,
    } else {
    }
    %5 = arith.truncf %1 : vector<64x256xf32> to vector<64x256xbf16>
    %c0_3 = arith.constant 0 : index
    %c0_4 = arith.constant 0 : index
    %c0_5 = arith.constant 0 : index
    %6 = vector.load %arg3[%c0_3, %c0_4, %c0_5] : memref<1x48x64xbf16, #tpu.memory_space<vmem>>, vector<1x48x64xbf16>
    %7 = vector.shape_cast %6 : vector<1x48x64xbf16> to vector<48x64xbf16>
    %cst = arith.constant dense<0.000000e+00> : vector<48x256xf32>
    %8 = tpu.matmul %7, %5, %cst {dimension_numbers = #tpu.dot_dimension_numbers<[1], [0], [0], [1], [0, 0, 1, 1], [], []>} : vector<48x64xbf16>, vector<64x256xbf16>, vector<48x256xf32> -> vector<48x256xf32>
    %c0_6 = arith.constant 0 : index
    %c0_7 = arith.constant 0 : index
    %c0_8 = arith.constant 0 : index
    %9 = vector.load %arg4[%c0_6, %c0_7, %c0_8] : memref<1x48x1xf32, #tpu.memory_space<vmem>>, vector<1x48x1xf32>
    %10 = vector.shape_cast %9 : vector<1x48x1xf32> to vector<48x1xf32>
    %11 = vector.broadcast %10 : vector<48x1xf32> to vector<48x256xf32>
    %12 = arith.addf %8, %11 : vector<48x256xf32>
    %13 = vector.extract_strided_slice %12 {offsets = [0, 0], sizes = [32, 256], strides = [1, 1]} : vector<48x256xf32> to vector<32x256xf32>
    %14 = arith.truncf %13 : vector<32x256xf32> to vector<32x256xbf16>
    %15 = vector.extract_strided_slice %12 {offsets = [32, 0], sizes = [16, 256], strides = [1, 1]} : vector<48x256xf32> to vector<16x256xf32>
    %16 = arith.truncf %15 : vector<16x256xf32> to vector<16x256xbf16>
    %c0_9 = arith.constant 0 : index
    %c0_10 = arith.constant 0 : index
    %c0_11 = arith.constant 0 : index
    %17 = vector.load %arg5[%c0_9, %c0_10, %c0_11] : memref<1x16x256xbf16, #tpu.memory_space<vmem>>, vector<1x16x256xbf16>
    %18 = vector.shape_cast %17 : vector<1x16x256xbf16> to vector<16x256xbf16>
    %19 = vector.extract_strided_slice %14 {offsets = [0, 0], sizes = [16, 256], strides = [1, 1]} : vector<32x256xbf16> to vector<16x256xbf16>
    %20 = tpu.concatenate %18, %19 in 0 : vector<16x256xbf16>, vector<16x256xbf16> -> vector<32x256xbf16>
    %cst_12 = arith.constant dense<0.000000e+00> : vector<256x256xf32>
    %21 = tpu.matmul %20, %14, %cst_12 {dimension_numbers = #tpu.dot_dimension_numbers<[0], [0], [1], [1], [0, 1, 1, 1], [], []>} : vector<32x256xbf16>, vector<32x256xbf16>, vector<256x256xf32> -> vector<256x256xf32>
    %cst_13 = arith.constant dense<0xFF800000> : vector<256xf32>
    %22 = vector.multi_reduction <maximumf>, %21, %cst_13 [1] : vector<256x256xf32> to vector<256xf32>
    %23 = vector.shape_cast %22 : vector<256xf32> to vector<256x1xf32>
    %24 = vector.broadcast %23 : vector<256x1xf32> to vector<256x256xf32>
    %25 = arith.subf %21, %24 : vector<256x256xf32>
    %26 = arith.truncf %25 : vector<256x256xf32> to vector<256x256xbf16>
    %27 = math.exp %26 : vector<256x256xbf16>
    %28 = arith.extf %27 : vector<256x256xbf16> to vector<256x256xf32>
    %cst_14 = arith.constant dense<0.000000e+00> : vector<256xf32>
    %29 = vector.multi_reduction <add>, %28, %cst_14 [1] : vector<256x256xf32> to vector<256xf32>
    %30 = vector.shape_cast %29 : vector<256xf32> to vector<256x1xf32>
    %31 = tpu.reciprocal %30 {approx = true} : vector<256x1xf32> -> vector<256x1xf32>
    %32 = arith.truncf %31 : vector<256x1xf32> to vector<256x1xbf16>
    %33 = vector.broadcast %32 : vector<256x1xbf16> to vector<256x256xbf16>
    %34 = arith.mulf %27, %33 : vector<256x256xbf16>
    %cst_15 = arith.constant dense<0.000000e+00> : vector<16x256xf32>
    %35 = tpu.matmul %16, %34, %cst_15 {dimension_numbers = #tpu.dot_dimension_numbers<[1], [1], [0], [0], [0, 0, 1, 0], [], []>} : vector<16x256xbf16>, vector<256x256xbf16>, vector<16x256xf32> -> vector<16x256xf32>
    %c16_i32 = arith.constant 16 : i32
    %36 = arith.muli %arg1, %c16_i32 : i32
    %37 = tpu.assume_multiple %36, 16 : i32
    %38 = arith.index_cast %37 : i32 to index
    %c0_16 = arith.constant 0 : index
    %39 = vector.load %arg9[%38, %c0_16] : memref<64x256xf32, #tpu.memory_space<vmem>>, vector<16x256xf32>
    tpu.vector_store %arg9[%38, %c0_16], %35 {strides = array<i32>} : memref<64x256xf32, #tpu.memory_space<vmem>>, vector<16x256xf32>,
    %c0_17 = arith.constant 0 : index
    %c0_18 = arith.constant 0 : index
    %40 = vector.load %arg10[%c0_17, %c0_18] : memref<1x1xf32, #tpu.memory_space<vmem>>, vector<1x1xf32>
    %41 = vector.shape_cast %35 : vector<16x256xf32> to vector<1x16x256xf32>
    %cst_19 = arith.constant dense<0.000000e+00> : vector<1xf32>
    %42 = vector.multi_reduction <add>, %41, %cst_19 [1, 2] : vector<1x16x256xf32> to vector<1xf32>
    %43 = vector.shape_cast %42 : vector<1xf32> to vector<1x1x1xf32>
    %44 = vector.extract %43[0, 0, 0] : f32 from vector<1x1x1xf32>
    %45 = vector.broadcast %44 : f32 to vector<1x1xf32>
    %46 = arith.addf %40, %45 : vector<1x1xf32>
    %c0_20 = arith.constant 0 : index
    %c0_21 = arith.constant 0 : index
    %47 = vector.load %arg10[%c0_20, %c0_21] : memref<1x1xf32, #tpu.memory_space<vmem>>, vector<1x1xf32>
    tpu.vector_store %arg10[%c0_20, %c0_21], %46 {strides = array<i32>} : memref<1x1xf32, #tpu.memory_space<vmem>>, vector<1x1xf32>,
    %c0_22 = arith.constant 0 : index
    %c0_23 = arith.constant 0 : index
    %48 = vector.load %arg11[%c0_22, %c0_23] : memref<1x1xf32, #tpu.memory_space<vmem>>, vector<1x1xf32>
    %49 = arith.mulf %35, %35 : vector<16x256xf32>
    %50 = vector.shape_cast %49 : vector<16x256xf32> to vector<1x16x256xf32>
    %cst_24 = arith.constant dense<0.000000e+00> : vector<1xf32>
    %51 = vector.multi_reduction <add>, %50, %cst_24 [1, 2] : vector<1x16x256xf32> to vector<1xf32>
    %52 = vector.shape_cast %51 : vector<1xf32> to vector<1x1x1xf32>
    %53 = vector.extract %52[0, 0, 0] : f32 from vector<1x1x1xf32>
    %54 = vector.broadcast %53 : f32 to vector<1x1xf32>
    %55 = arith.addf %48, %54 : vector<1x1xf32>
    %c0_25 = arith.constant 0 : index
    %c0_26 = arith.constant 0 : index
    %56 = vector.load %arg11[%c0_25, %c0_26] : memref<1x1xf32, #tpu.memory_space<vmem>>, vector<1x1xf32>
    tpu.vector_store %arg11[%c0_25, %c0_26], %55 {strides = array<i32>} : memref<1x1xf32, #tpu.memory_space<vmem>>, vector<1x1xf32>,
    %c3_i32 = arith.constant 3 : i32
    %57 = arith.cmpi eq, %arg1, %c3_i32 : i32
    %58 = arith.extui %57 : i1 to i32
    %c0_i32_27 = arith.constant 0 : i32
    %59 = arith.cmpi ne, %58, %c0_i32_27 : i32
    scf.if %59 {
      %c0_28 = arith.constant 0 : index
      %c0_29 = arith.constant 0 : index
      %60 = vector.load %arg9[%c0_28, %c0_29] : memref<64x256xf32, #tpu.memory_space<vmem>>, vector<64x256xf32>
      %c0_30 = arith.constant 0 : index
      %c0_31 = arith.constant 0 : index
      %61 = vector.load %arg10[%c0_30, %c0_31] : memref<1x1xf32, #tpu.memory_space<vmem>>, vector<1x1xf32>
      %cst_32 = arith.constant 6.10351563E-5 : f32
      %62 = vector.broadcast %cst_32 : f32 to vector<1x1xf32>
      %63 = arith.mulf %61, %62 : vector<1x1xf32>
      %c0_33 = arith.constant 0 : index
      %c0_34 = arith.constant 0 : index
      %64 = vector.load %arg11[%c0_33, %c0_34] : memref<1x1xf32, #tpu.memory_space<vmem>>, vector<1x1xf32>
      %cst_35 = arith.constant 6.10351563E-5 : f32
      %65 = vector.broadcast %cst_35 : f32 to vector<1x1xf32>
      %66 = arith.mulf %64, %65 : vector<1x1xf32>
      %67 = arith.mulf %63, %63 : vector<1x1xf32>
      %68 = arith.subf %66, %67 : vector<1x1xf32>
      %69 = vector.broadcast %63 : vector<1x1xf32> to vector<64x256xf32>
      %70 = arith.subf %60, %69 : vector<64x256xf32>
      %cst_36 = arith.constant 9.99999974E-6 : f32
      %71 = vector.broadcast %cst_36 : f32 to vector<1x1xf32>
      %72 = arith.addf %68, %71 : vector<1x1xf32>
      %73 = math.rsqrt %72 : vector<1x1xf32>
      %74 = vector.broadcast %73 : vector<1x1xf32> to vector<64x256xf32>
      %75 = arith.mulf %70, %74 : vector<64x256xf32>
      %c0_37 = arith.constant 0 : index
      %c0_38 = arith.constant 0 : index
      %76 = vector.load %arg6[%c0_37, %c0_38] : memref<64x256xf32, #tpu.memory_space<vmem>>, vector<64x256xf32>
      %77 = arith.mulf %75, %76 : vector<64x256xf32>
      %c0_39 = arith.constant 0 : index
      %c0_40 = arith.constant 0 : index
      %78 = vector.load %arg7[%c0_39, %c0_40] : memref<64x256xf32, #tpu.memory_space<vmem>>, vector<64x256xf32>
      %79 = arith.addf %77, %78 : vector<64x256xf32>
      %80 = arith.addf %79, %1 : vector<64x256xf32>
      %c0_41 = arith.constant 0 : index
      %c0_42 = arith.constant 0 : index
      %c0_43 = arith.constant 0 : index
      %81 = vector.load %arg8[%c0_41, %c0_42, %c0_43] : memref<1x64x256xf32, #tpu.memory_space<vmem>>, vector<1x64x256xf32>
      %82 = vector.shape_cast %81 : vector<1x64x256xf32> to vector<64x256xf32>
      %83 = vector.shape_cast %80 : vector<64x256xf32> to vector<1x64x256xf32>
      tpu.vector_store %arg8[%c0_41, %c0_42, %c0_43], %83 {strides = array<i32>} : memref<1x64x256xf32, #tpu.memory_space<vmem>>, vector<1x64x256xf32>,
    } else {
    }
    return
  }
  func.func @transform_0(%arg0: i32, %arg1: i32) -> (i32, i32, i32) {
    %c0_i32 = arith.constant 0 : i32
    %c0_i32_0 = arith.constant 0 : i32
    %c0_i32_1 = arith.constant 0 : i32
    return %arg0, %c0_i32, %c0_i32_0 : i32, i32, i32
  }
  func.func @transform_1(%arg0: i32, %arg1: i32) -> (i32, i32, i32) {
    %c0_i32 = arith.constant 0 : i32
    %c0_i32_0 = arith.constant 0 : i32
    %c0_i32_1 = arith.constant 0 : i32
    return %arg1, %c0_i32, %c0_i32_0 : i32, i32, i32
  }
  func.func @transform_2(%arg0: i32, %arg1: i32) -> (i32, i32, i32) {
    %c0_i32 = arith.constant 0 : i32
    %c0_i32_0 = arith.constant 0 : i32
    %c0_i32_1 = arith.constant 0 : i32
    return %arg1, %c0_i32, %c0_i32_0 : i32, i32, i32
  }
  func.func @transform_3(%arg0: i32, %arg1: i32) -> (i32, i32, i32) {
    %c0_i32 = arith.constant 0 : i32
    %c0_i32_0 = arith.constant 0 : i32
    %c0_i32_1 = arith.constant 0 : i32
    return %arg1, %c0_i32, %c0_i32_0 : i32, i32, i32
  }
  func.func @transform_4(%arg0: i32, %arg1: i32) -> (i32, i32) {
    %c0_i32 = arith.constant 0 : i32
    %c0_i32_0 = arith.constant 0 : i32
    %c0_i32_1 = arith.constant 0 : i32
    return %c0_i32, %c0_i32_0 : i32, i32
  }
  func.func @transform_5(%arg0: i32, %arg1: i32) -> (i32, i32) {
    %c0_i32 = arith.constant 0 : i32
    %c0_i32_0 = arith.constant 0 : i32
    %c0_i32_1 = arith.constant 0 : i32
    return %c0_i32, %c0_i32_0 : i32, i32
  }
  func.func @transform_6(%arg0: i32, %arg1: i32) -> (i32, i32, i32) {
    %c0_i32 = arith.constant 0 : i32
    %c0_i32_0 = arith.constant 0 : i32
    %c0_i32_1 = arith.constant 0 : i32
    return %arg0, %c0_i32, %c0_i32_0 : i32, i32, i32
  }
}

</mosaic_0001>

<llo_original>
// kernel: tpu_custom_call.1
$region0: #{tpu_custom_call.1}
  #allocation0 [shape = 'u32[]', space=smem, size = 0x4, offset = 0x4, fixed_abs, tag = 'smem constant byte address 0x4 - core index']
  #allocation1 [shape = 'u32[144,128]{1,0:T(1,128)}', space=vmem, size = 0x12000, scoped, tag = 'internal scratch']
  #allocation2 [shape = 'f32[64,256]{1,0:T(8,128)}', space=vmem, size = 0x10000, scoped, tag = 'scratch operand']
  #allocation3 [shape = 'f32[1,1]{1,0:T(1,128)}', space=vmem, size = 0x200, scoped, tag = 'scratch operand']
  #allocation4 [shape = 'f32[1,1]{1,0:T(1,128)}', space=vmem, size = 0x200, scoped, tag = 'scratch operand']
  %s0 = inlined_call_operand.hbm [shape: f32[2,64,256], index: 0, kind: input, shape index: {}]
  %s1 = inlined_call_operand.hbm [shape: bf16[4,48,64], index: 1, kind: input, shape index: {}]
  %s2 = inlined_call_operand.vmem [shape: f32[4,48,1], index: 2, kind: input, shape index: {}]
  %s3 = inlined_call_operand.vmem [shape: bf16[4,16,256], index: 3, kind: input, shape index: {}]
  %s4 = inlined_call_operand.vmem [shape: f32[64,256], index: 4, kind: input, shape index: {}]
  %s5 = inlined_call_operand.hbm [shape: f32[64,256], index: 5, kind: input, shape index: {}]
  %s6 = inlined_call_operand.hbm [shape: f32[2,64,256], index: 6, kind: output, shape index: {}]
  %s7 = sld [smem:[#allocation0]]
  $region77: #{tpu_custom_call.1} parent=0
    _
  %s9 = ssub.s32 1, %s7
  %s10 = scalar_select 0, %s9, %s7
  $region1: #{tpu_custom_call.1} parent=0
    #allocation5 [shape = 'u8[131072]{0}', space=vmem, size = 0x20000, scoped, tag = 'input window, operand 0']
    #allocation6 [shape = 's32[2]{0}', space=sflag, size = 0x8, scoped, tag = 'scoped memory for tpu_custom_call.1']
    #allocation7 [shape = 's32[2]{0}', space=sflag, size = 0x8, scoped, tag = 'scoped memory for tpu_custom_call.1']
    #allocation8 [shape = 'u8[24576]{0}', space=vmem, size = 0x6000, scoped, tag = 'input window, operand 1']
    #allocation9 [shape = 's32[2]{0}', space=sflag, size = 0x8, scoped, tag = 'scoped memory for tpu_custom_call.1']
    #allocation10 [shape = 'u8[65536]{0}', space=vmem, size = 0x10000, scoped, tag = 'input window, operand 5, single buffered']
    #allocation11 [shape = 'u8[131072]{0}', space=vmem, size = 0x20000, scoped, tag = 'output window, operand 0']
    %11 = vsyncpa [#allocation6], 0
    %s12 = scalar_lea.sflag [#allocation6], 1
    %13 = vsyncpa %s12, 0
    %14 = vsyncpa [#allocation9], 0
    %s15 = scalar_lea.sflag [#allocation9], 1
    %16 = vsyncpa %s15, 0
    %17 = vsyncpa [#allocation7], 0
    %s18 = scalar_lea.sflag [#allocation7], 1
    %19 = vsyncpa %s18, 0
    loop: start=0, step=1, limit=10
    $region2: #{tpu_custom_call.1} parent=1 // loop_pre_header
      _
    $region3: #{tpu_custom_call.1} parent=1 // loop_header
      %s21 = sphi 0, %s25
      %p22 = scmp.ge.s32.totalorder %s21, 10
      %s28 = sphi 0, %s40
      %s29 = sphi 0, %s36
      %s30 = sphi 0, %s28
      %s31 = sphi 0, %s29
      %s32 = sphi 0, %s30
      %s33 = sphi 0, %s31
      %s43 = sphi 0, %s45
      %s46 = sphi 0, %s43
      %s47 = sphi 0, %s46
      %s63 = sphi 0, %s47
      %s69 = sphi 0, %s71
      %s72 = sphi 0, %s69
      %s73 = sphi 0, %s72
      %s89 = sphi 0, %s73
      %s95 = sphi 0, %s97
      %s98 = sphi 0, %s95
      %s99 = sphi 0, %s98
      %s115 = sphi 0, %s99
      %s121 = sphi 0, %s123
      %s124 = sphi 0, %s121
      %s125 = sphi 0, %s124
      %s141 = sphi 0, %s125
      %s145 = sphi 0, %s145
      %s147 = sphi 0, %s145
      %s148 = sphi 0, %s147
      %s162 = sphi 0, %s148
      %s166 = sphi 0, %s166
      %s168 = sphi 0, %s166
      %s169 = sphi 0, %s168
      %s183 = sphi 0, %s169
      %s189 = sphi 0, %s191
      %s192 = sphi 0, %s189
      %s193 = sphi 0, %s192
      %s209 = sphi 0, %s193
    $region4: #{tpu_custom_call.1} parent=1 // loop_header_branch
      %24 = sbr.rel (%p22) target = $region8
    $region5: #{tpu_custom_call.1} parent=1 // loop_body
      %s26 = ssub.s32 %s21, 1
      %s27 = ssub.s32 %s21, 2
      %s34 = sadd.s32 1, %s29
      %p35 = scmp.ge.s32.totalorder %s34, 4
      %s36 = scalar_select %p35, 0, %s34
      %s37 = sadd.s32 1, %s28
      %s38 = scalar_select %p35, %s37, %s28
      %p39 = scmp.ge.s32.totalorder %s38, 2
      %s40 = scalar_select %p39, 0, %s38
      %s41 = ssub.s32 %s28, %s40
      %p42 = scmp.eq.s32.totalorder %s41, 0
      %s44 = sadd.s32 %s43, 1
      %s45 = scalar_select %p42, %s43, %s44
      %p48 = pneg %p42
      %p49 = scmp.eq.s32.totalorder %s21, 7
      %p50 = por %p48, %p49
      %p51 = scmp.ne.s32.totalorder %s43, %s46
      %p52 = scmp.eq.s32.totalorder %s21, 0
      %p53 = por %p51, %p52
      %p54 = scmp.ne.s32.totalorder %s43, %s46
      %p55 = scmp.eq.s32.totalorder %s26, 7
      %p56 = por %p54, %p55
      %p57 = scmp.ne.s32.totalorder %s46, %s47
      %p58 = scmp.eq.s32.totalorder %s26, 0
      %p59 = por %p57, %p58
      %p60 = scmp.ne.s32.totalorder %s46, %s47
      %p61 = scmp.eq.s32.totalorder %s27, 7
      %p62 = por %p60, %p61
      %p64 = scmp.ne.s32.totalorder %s47, %s63
      %p65 = scmp.eq.s32.totalorder %s27, 0
      %p66 = por %p64, %p65
      %s67 = ssub.s32 %s29, %s36
      %p68 = scmp.eq.s32.totalorder %s67, 0
      %s70 = sadd.s32 %s69, 1
      %s71 = scalar_select %p68, %s69, %s70
      %p74 = pneg %p68
      %p75 = scmp.eq.s32.totalorder %s21, 7
      %p76 = por %p74, %p75
      %p77 = scmp.ne.s32.totalorder %s69, %s72
      %p78 = scmp.eq.s32.totalorder %s21, 0
      %p79 = por %p77, %p78
      %p80 = scmp.ne.s32.totalorder %s69, %s72
      %p81 = scmp.eq.s32.totalorder %s26, 7
      %p82 = por %p80, %p81
      %p83 = scmp.ne.s32.totalorder %s72, %s73
      %p84 = scmp.eq.s32.totalorder %s26, 0
      %p85 = por %p83, %p84
      %p86 = scmp.ne.s32.totalorder %s72, %s73
      %p87 = scmp.eq.s32.totalorder %s27, 7
      %p88 = por %p86, %p87
      %p90 = scmp.ne.s32.totalorder %s73, %s89
      %p91 = scmp.eq.s32.totalorder %s27, 0
      %p92 = por %p90, %p91
      %s93 = ssub.s32 %s29, %s36
      %p94 = scmp.eq.s32.totalorder %s93, 0
      %s96 = sadd.s32 %s95, 1
      %s97 = scalar_select %p94, %s95, %s96
      %p100 = pneg %p94
      %p101 = scmp.eq.s32.totalorder %s21, 7
      %p102 = por %p100, %p101
      %p103 = scmp.ne.s32.totalorder %s95, %s98
      %p104 = scmp.eq.s32.totalorder %s21, 0
      %p105 = por %p103, %p104
      %p106 = scmp.ne.s32.totalorder %s95, %s98
      %p107 = scmp.eq.s32.totalorder %s26, 7
      %p108 = por %p106, %p107
      %p109 = scmp.ne.s32.totalorder %s98, %s99
      %p110 = scmp.eq.s32.totalorder %s26, 0
      %p111 = por %p109, %p110
      %p112 = scmp.ne.s32.totalorder %s98, %s99
      %p113 = scmp.eq.s32.totalorder %s27, 7
      %p114 = por %p112, %p113
      %p116 = scmp.ne.s32.totalorder %s99, %s115
      %p117 = scmp.eq.s32.totalorder %s27, 0
      %p118 = por %p116, %p117
      %s119 = ssub.s32 %s29, %s36
      %p120 = scmp.eq.s32.totalorder %s119, 0
      %s122 = sadd.s32 %s121, 1
      %s123 = scalar_select %p120, %s121, %s122
      %p126 = pneg %p120
      %p127 = scmp.eq.s32.totalorder %s21, 7
      %p128 = por %p126, %p127
      %p129 = scmp.ne.s32.totalorder %s121, %s124
      %p130 = scmp.eq.s32.totalorder %s21, 0
      %p131 = por %p129, %p130
      %p132 = scmp.ne.s32.totalorder %s121, %s124
      %p133 = scmp.eq.s32.totalorder %s26, 7
      %p134 = por %p132, %p133
      %p135 = scmp.ne.s32.totalorder %s124, %s125
      %p136 = scmp.eq.s32.totalorder %s26, 0
      %p137 = por %p135, %p136
      %p138 = scmp.ne.s32.totalorder %s124, %s125
      %p139 = scmp.eq.s32.totalorder %s27, 7
      %p140 = por %p138, %p139
      %p142 = scmp.ne.s32.totalorder %s125, %s141
      %p143 = scmp.eq.s32.totalorder %s27, 0
      %p144 = por %p142, %p143
      %s146 = sadd.s32 %s145, 1
      %p149 = scmp.eq.s32.totalorder %s21, 7
      %p150 = scmp.ne.s32.totalorder %s145, %s147
      %p151 = scmp.eq.s32.totalorder %s21, 0
      %p152 = por %p150, %p151
      %p153 = scmp.ne.s32.totalorder %s145, %s147
      %p154 = scmp.eq.s32.totalorder %s26, 7
      %p155 = por %p153, %p154
      %p156 = scmp.ne.s32.totalorder %s147, %s148
      %p157 = scmp.eq.s32.totalorder %s26, 0
      %p158 = por %p156, %p157
      %p159 = scmp.ne.s32.totalorder %s147, %s148
      %p160 = scmp.eq.s32.totalorder %s27, 7
      %p161 = por %p159, %p160
      %p163 = scmp.ne.s32.totalorder %s148, %s162
      %p164 = scmp.eq.s32.totalorder %s27, 0
      %p165 = por %p163, %p164
      %s167 = sadd.s32 %s166, 1
      %p170 = scmp.eq.s32.totalorder %s21, 7
      %p171 = scmp.ne.s32.totalorder %s166, %s168
      %p172 = scmp.eq.s32.totalorder %s21, 0
      %p173 = por %p171, %p172
      %p174 = scmp.ne.s32.totalorder %s166, %s168
      %p175 = scmp.eq.s32.totalorder %s26, 7
      %p176 = por %p174, %p175
      %p177 = scmp.ne.s32.totalorder %s168, %s169
      %p178 = scmp.eq.s32.totalorder %s26, 0
      %p179 = por %p177, %p178
      %p180 = scmp.ne.s32.totalorder %s168, %s169
      %p181 = scmp.eq.s32.totalorder %s27, 7
      %p182 = por %p180, %p181
      %p184 = scmp.ne.s32.totalorder %s169, %s183
      %p185 = scmp.eq.s32.totalorder %s27, 0
      %p186 = por %p184, %p185
      %s187 = ssub.s32 %s28, %s40
      %p188 = scmp.eq.s32.totalorder %s187, 0
      %s190 = sadd.s32 %s189, 1
      %s191 = scalar_select %p188, %s189, %s190
      %p194 = pneg %p188
      %p195 = scmp.eq.s32.totalorder %s21, 7
      %p196 = por %p194, %p195
      %p197 = scmp.ne.s32.totalorder %s189, %s192
      %p198 = scmp.eq.s32.totalorder %s21, 0
      %p199 = por %p197, %p198
      %p200 = scmp.ne.s32.totalorder %s189, %s192
      %p201 = scmp.eq.s32.totalorder %s26, 7
      %p202 = por %p200, %p201
      %p203 = scmp.ne.s32.totalorder %s192, %s193
      %p204 = scmp.eq.s32.totalorder %s26, 0
      %p205 = por %p203, %p204
      %p206 = scmp.ne.s32.totalorder %s192, %s193
      %p207 = scmp.eq.s32.totalorder %s27, 7
      %p208 = por %p206, %p207
      %p210 = scmp.ne.s32.totalorder %s193, %s209
      %p211 = scmp.eq.s32.totalorder %s27, 0
      %p212 = por %p210, %p211
      %p213 = scmp.le.s32.totalorder 1, %s21
      %p214 = scmp.lt.s32.totalorder %s21, 9
      %p215 = pnand %p213, %p214
      %p216 = pneg %p215
      // Predicated region
      $region9: #{tpu_custom_call.1} parent=5 // pred_check
        _
      $region10: #{tpu_custom_call.1} parent=5 // pred_check_branch
        %218 = sbr.rel (%p215) target = $region12
      $region11: #{tpu_custom_call.1} parent=5 // pred_region
        %s219 = ssub.s32 %s21, 1
        // Predicated region
        $region13: #{tpu_custom_call.1} parent=11 // pred_check
          %p220 = pneg %p158
        $region14: #{tpu_custom_call.1} parent=11 // pred_check_branch
          %222 = sbr.rel (%p220) target = $region16
        $region15: #{tpu_custom_call.1} parent=11 // pred_region
          _
        $region16: #{tpu_custom_call.1} parent=11 // pred_fallthru
          _
        // Predicated region
        $region17: #{tpu_custom_call.1} parent=11 // pred_check
          %p223 = pneg %p179
        $region18: #{tpu_custom_call.1} parent=11 // pred_check_branch
          %225 = sbr.rel (%p223) target = $region20
        $region19: #{tpu_custom_call.1} parent=11 // pred_region
          %s227 = ssub.s32 2048, 2048
          %228 = vsyncadd [#allocation9], %s227
          %s229 = sshll.u32 [#allocation10], 4
          %s230 = int_to_ptr.vmem [resolvable:$true] %s229
          %235 = dma.hbm_to_vmem [thread:$0]  %s5, 2048, %s230, [#allocation9], 256, 256, 16
        $region20: #{tpu_custom_call.1} parent=11 // pred_fallthru
          _
      $region12: #{tpu_custom_call.1} parent=5 // pred_fallthru
        _
      %p236 = scmp.lt.s32.totalorder %s21, 8
      // Predicated region
      $region21: #{tpu_custom_call.1} parent=5 // pred_check
        %p237 = pneg %p236
      $region22: #{tpu_custom_call.1} parent=5 // pred_check_branch
        %239 = sbr.rel (%p237) target = $region24
      $region23: #{tpu_custom_call.1} parent=5 // pred_region
        // Predicated region
        $region25: #{tpu_custom_call.1} parent=23 // pred_check
          %p240 = pneg %p53
        $region26: #{tpu_custom_call.1} parent=23 // pred_check_branch
          %242 = sbr.rel (%p240) target = $region28
        $region27: #{tpu_custom_call.1} parent=23 // pred_region
          %s243 = sand.u32 %s43, 1
          %s244 = scalar_lea.sflag [#allocation6], %s243
          %s245 = sand.u32 %s43, 1
          %s246 = smul.addr %s245, 128
          %s247 = scalar_lea.vmem [#allocation5], %s246
          %s249 = ssub.s32 2048, 2048
          %250 = vsyncadd %s244, %s249
          %s251 = smul.addr %s28, 16
          %s252 = smul.addr %s251, 128
          %s253 = scalar_lea.hbm %s0, %s252
          %s254 = sshll.u32 %s247, 4
          %s255 = int_to_ptr.vmem [resolvable:$true] %s254
          %260 = dma.hbm_to_vmem [thread:$0]  %s253, 2048, %s255, %s244, 256, 256, 16
        $region28: #{tpu_custom_call.1} parent=23 // pred_fallthru
          _
        // Predicated region
        $region29: #{tpu_custom_call.1} parent=23 // pred_check
          %p261 = pneg %p79
        $region30: #{tpu_custom_call.1} parent=23 // pred_check_branch
          %263 = sbr.rel (%p261) target = $region32
        $region31: #{tpu_custom_call.1} parent=23 // pred_region
          %s264 = sand.u32 %s21, 1
          %s265 = scalar_lea.sflag [#allocation9], %s264
          %s266 = sand.u32 %s69, 1
          %s267 = smul.addr %s266, 24
          %s268 = scalar_lea.vmem [#allocation8], %s267
          %s270 = ssub.s32 384, 384
          %271 = vsyncadd %s265, %s270
          %s272 = smul.addr %s29, 6
          %s273 = smul.addr %s272, 64
          %s274 = scalar_lea.hbm %s1, %s273
          %s275 = sshll.u32 %s268, 4
          %s276 = int_to_ptr.vmem [resolvable:$true] %s275
          %281 = dma.hbm_to_vmem [thread:$0]  %s274, 384, %s276, %s265, 64, 64, 4
        $region32: #{tpu_custom_call.1} parent=23 // pred_fallthru
          _
        // Predicated region
        $region33: #{tpu_custom_call.1} parent=23 // pred_check
          %p282 = pneg %p105
        $region34: #{tpu_custom_call.1} parent=23 // pred_check_branch
          %284 = sbr.rel (%p282) target = $region36
        $region35: #{tpu_custom_call.1} parent=23 // pred_region
          %p285 = scmp.lt.s32.totalorder %s29, 3
          %s286 = scalar_select %p285, %s29, 3
          %s287 = smul.addr %s286, 6
          %s288 = smul.addr %s287, 8
          %s289 = scalar_lea.vmem %s2, %s288
        $region36: #{tpu_custom_call.1} parent=23 // pred_fallthru
          _
        // Predicated region
        $region37: #{tpu_custom_call.1} parent=23 // pred_check
          %p290 = pneg %p131
        $region38: #{tpu_custom_call.1} parent=23 // pred_check_branch
          %292 = sbr.rel (%p290) target = $region40
        $region39: #{tpu_custom_call.1} parent=23 // pred_region
          %p293 = scmp.lt.s32.totalorder %s29, 3
          %s294 = scalar_select %p293, %s29, 3
          %s295 = smul.addr %s294, 4
          %s296 = smul.addr %s295, 4
          %s297 = scalar_lea.vmem %s3, %s296
        $region40: #{tpu_custom_call.1} parent=23 // pred_fallthru
          _
      $region24: #{tpu_custom_call.1} parent=5 // pred_fallthru
        _
      %p298 = scmp.le.s32.totalorder 1, %s21
      %p299 = scmp.lt.s32.totalorder %s21, 9
      %p300 = pnand %p298, %p299
      %p301 = pneg %p300
      // Predicated region
      $region41: #{tpu_custom_call.1} parent=5 // pred_check
        _
      $region42: #{tpu_custom_call.1} parent=5 // pred_check_branch
        %303 = sbr.rel (%p300) target = $region44
      $region43: #{tpu_custom_call.1} parent=5 // pred_region
        %s304 = ssub.s32 %s21, 1
        %s305 = sand.u32 %s46, 1
        %s306 = scalar_lea.sflag [#allocation6], %s305
        %s307 = sand.u32 %s46, 1
        %s308 = smul.addr %s307, 128
        %s309 = scalar_lea.vmem [#allocation5], %s308
        // Predicated region
        $region45: #{tpu_custom_call.1} parent=43 // pred_check
          %p310 = pneg %p59
        $region46: #{tpu_custom_call.1} parent=43 // pred_check_branch
          %312 = sbr.rel (%p310) target = $region48
        $region47: #{tpu_custom_call.1} parent=43 // pred_region
          %313 = dma.done %s306, 2048
        $region48: #{tpu_custom_call.1} parent=43 // pred_fallthru
          _
        %s314 = sand.u32 %s26, 1
        %s315 = scalar_lea.sflag [#allocation9], %s314
        %s316 = sand.u32 %s72, 1
        %s317 = smul.addr %s316, 24
        %s318 = scalar_lea.vmem [#allocation8], %s317
        // Predicated region
        $region49: #{tpu_custom_call.1} parent=43 // pred_check
          %p319 = pneg %p85
        $region50: #{tpu_custom_call.1} parent=43 // pred_check_branch
          %321 = sbr.rel (%p319) target = $region52
        $region51: #{tpu_custom_call.1} parent=43 // pred_region
          %322 = dma.done %s315, 384
        $region52: #{tpu_custom_call.1} parent=43 // pred_fallthru
          _
        // Predicated region
        $region53: #{tpu_custom_call.1} parent=43 // pred_check
          %p323 = pneg %p179
        $region54: #{tpu_custom_call.1} parent=43 // pred_check_branch
          %325 = sbr.rel (%p323) target = $region56
        $region55: #{tpu_custom_call.1} parent=43 // pred_region
          %326 = dma.done [#allocation9], 2048
        $region56: #{tpu_custom_call.1} parent=43 // pred_fallthru
          _
        %s327 = sand.u32 %s46, 1
        %s328 = scalar_lea.sflag [#allocation6], %s327
        %s329 = sand.u32 %s46, 1
        %s330 = smul.addr %s329, 128
        %s331 = scalar_lea.vmem [#allocation5], %s330
        %p332 = pneg %p59
        %p333 = pneg %p56
        %s334 = sand.u32 %s26, 1
        %s335 = scalar_lea.sflag [#allocation9], %s334
        %s336 = sand.u32 %s72, 1
        %s337 = smul.addr %s336, 24
        %s338 = scalar_lea.vmem [#allocation8], %s337
        %p339 = pneg %p85
        %p340 = pneg %p82
        %p341 = scmp.lt.s32.totalorder %s31, 3
        %s342 = scalar_select %p341, %s31, 3
        %s343 = smul.addr %s342, 6
        %s344 = smul.addr %s343, 8
        %s345 = scalar_lea.vmem %s2, %s344
        %p346 = pneg %p111
        %p347 = pneg %p108
        %p348 = scmp.lt.s32.totalorder %s31, 3
        %s349 = scalar_select %p348, %s31, 3
        %s350 = smul.addr %s349, 4
        %s351 = smul.addr %s350, 4
        %s352 = scalar_lea.vmem %s3, %s351
        %p353 = pneg %p137
        %p354 = pneg %p134
        %p355 = pneg %p158
        %p356 = pneg %p155
        %p357 = pneg %p179
        %p358 = pneg %p176
        %p359 = pneg %p205
        %p360 = pneg %p202
        %s361 = sand.u32 %s192, 1
        %s362 = scalar_lea.sflag [#allocation7], %s361
        %s363 = sand.u32 %s192, 1
        %s364 = smul.addr %s363, 128
        %s365 = scalar_lea.vmem [#allocation11], %s364
        %p366 = scmp.lt.s32.totalorder %s31, 3
        %s367 = scalar_select %p366, %s31, 3
        %s368 = smul.addr %s367, 6
        %s369 = smul.addr %s368, 8
        %s370 = scalar_lea.vmem %s2, %s369
        %p371 = scmp.lt.s32.totalorder %s31, 3
        %s372 = scalar_select %p371, %s31, 3
        %s373 = smul.addr %s372, 4
        %s374 = smul.addr %s373, 4
        %s375 = scalar_lea.vmem %s3, %s374
        %v377 = vld [vmem:[%s309] sm:$0xff]
        %v378 = vld [vmem:[%s309 + $0x8] sm:$0xff]
        %v379 = vld [vmem:[%s309 + $0x10] sm:$0xff]
        %v380 = vld [vmem:[%s309 + $0x18] sm:$0xff]
        %v381 = vld [vmem:[%s309 + $0x20] sm:$0xff]
        %v382 = vld [vmem:[%s309 + $0x28] sm:$0xff]
        %v383 = vld [vmem:[%s309 + $0x30] sm:$0xff]
        %v384 = vld [vmem:[%s309 + $0x38] sm:$0xff]
        %v385 = vld [vmem:[%s309 + $0x40] sm:$0xff]
        %v386 = vld [vmem:[%s309 + $0x48] sm:$0xff]
        %v387 = vld [vmem:[%s309 + $0x50] sm:$0xff]
        %v388 = vld [vmem:[%s309 + $0x58] sm:$0xff]
        %v389 = vld [vmem:[%s309 + $0x60] sm:$0xff]
        %v390 = vld [vmem:[%s309 + $0x68] sm:$0xff]
        %v391 = vld [vmem:[%s309 + $0x70] sm:$0xff]
        %v392 = vld [vmem:[%s309 + $0x78] sm:$0xff]
        %p393 = scmp.eq.s32.totalorder %s31, 0
        // Predicated region
        $region57: #{tpu_custom_call.1} parent=43 // pred_check
          %p394 = pneg %p393
        $region58: #{tpu_custom_call.1} parent=43 // pred_check_branch
          %396 = sbr.rel (%p394) target = $region60
        $region59: #{tpu_custom_call.1} parent=43 // pred_region
          %vm397 = vcmask 0
          %398 = vst.msk [vmem:[#allocation3] sm:$0x1] %vm397, 0.0
          %399 = vst.msk [vmem:[#allocation4] sm:$0x1] %vm397, 0.0
        $region60: #{tpu_custom_call.1} parent=43 // pred_fallthru
          _
        %v400 = vpack.c.bf16 %v379, %v377
        %v401 = vpack.c.bf16 %v380, %v378
        %v402 = vpack.c.bf16 %v383, %v381
        %v403 = vpack.c.bf16 %v384, %v382
        %v404 = vpack.c.bf16 %v387, %v385
        %v405 = vpack.c.bf16 %v388, %v386
        %v406 = vpack.c.bf16 %v391, %v389
        %v407 = vpack.c.bf16 %v392, %v390
        %v408 = vld [vmem:[%s318] sm:$0xf]
        %v409 = vld [vmem:[%s318 + $0x4] sm:$0xf]
        %v410 = vld [vmem:[%s318 + $0x8] sm:$0xf]
        %v411 = vld [vmem:[%s318 + $0xc] sm:$0xf]
        %v412 = vld [vmem:[%s318 + $0x10] sm:$0xf]
        %v413 = vld [vmem:[%s318 + $0x14] sm:$0xf]
        %v414 = vld [vmem:[%s370] sm:$0xff]
        %v415 = vld [vmem:[%s370 + $0x8] sm:$0xff]
        %v416 = vld [vmem:[%s370 + $0x10] sm:$0xff]
        %v417 = vld [vmem:[%s370 + $0x18] sm:$0xff]
        %v418 = vld [vmem:[%s370 + $0x20] sm:$0xff]
        %v419 = vld [vmem:[%s370 + $0x28] sm:$0xff]
        %421 = vset.pattern.permute.xlu0 0
        %422 = vperm.xlu0 %421, %v414
        %v423 = vpop.permute.xlu0 %422
        %426 = vset.pattern.permute.xlu0 0
        %427 = vperm.xlu0 %426, %v415
        %v428 = vpop.permute.xlu0 %427
        %431 = vset.pattern.permute.xlu0 0
        %432 = vperm.xlu0 %431, %v416
        %v433 = vpop.permute.xlu0 %432
        %436 = vset.pattern.permute.xlu0 0
        %437 = vperm.xlu0 %436, %v417
        %v438 = vpop.permute.xlu0 %437
        %441 = vset.pattern.permute.xlu0 0
        %442 = vperm.xlu0 %441, %v418
        %v443 = vpop.permute.xlu0 %442
        %446 = vset.pattern.permute.xlu0 0
        %447 = vperm.xlu0 %446, %v419
        %v448 = vpop.permute.xlu0 %447
        %v456 = vunpack.c.l.b16 %v408
        %v457 = vunpack.c.l.b16 %v409
        %v458 = vunpack.c.l.b16 %v410
        %v459 = vunpack.c.l.b16 %v411
        %v460 = vunpack.c.l.b16 %v412
        %v461 = vunpack.c.l.b16 %v413
        %v462 = vpack.c.b16 %v457, %v456
        %v463 = vpack.c.b16 %v459, %v458
        %v464 = vpack.c.b16 %v461, %v460
        %vm465 = vcmask 523264
        %v467 = vsel %vm465, %v462, 0
        %v470 = vsel %vm465, %v463, 0
        %v473 = vsel %vm465, %v464, 0
        %475 = vmatprep.subr.bf16.mxu0 %v401
        %476 = vmatpush1.bf16.msra.mxu0 %v400
        %477 = vmatprep.subr.bf16.mxu0 %v403
        %478 = vmatpush1.bf16.msra.mxu0 %v402
        %479 = vmatprep.subr.bf16.mxu0 %v405
        %480 = vmatpush1.bf16.msra.mxu0 %v404
        %481 = vmatprep.subr.bf16.mxu0 %v407
        %482 = vmatpush1.bf16.msra.mxu0 %v406
        %483 = vmatprep.subr.bf16.mxu0 0
        %484 = vmatpush1.bf16.msra.mxu0 0
        %485 = vmatprep.subr.bf16.mxu0 0
        %486 = vmatpush1.bf16.msra.mxu0 0
        %487 = vmatprep.subr.bf16.mxu0 0
        %488 = vmatpush1.bf16.msra.mxu0 0
        %489 = vmatprep.subr.bf16.mxu0 0
        %490 = vmatpush1.bf16.msra.mxu0 0
        %491 = vmatprep.subr.bf16.mxu0 0
        %492 = vmatpush1.bf16.msra.mxu0 0
        %493 = vmatprep.subr.bf16.mxu0 0
        %494 = vmatpush1.bf16.msra.mxu0 0
        %495 = vmatprep.subr.bf16.mxu0 0
        %496 = vmatpush1.bf16.msra.mxu0 0
        %497 = vmatprep.subr.bf16.mxu0 0
        %498 = vmatpush1.bf16.msra.mxu0 0
        %499 = vmatprep.subr.bf16.mxu0 0
        %500 = vmatpush1.bf16.msra.mxu0 0
        %501 = vmatprep.subr.bf16.mxu0 0
        %502 = vmatpush1.bf16.msra.mxu0 0
        %503 = vmatprep.subr.bf16.mxu0 0
        %504 = vmatpush1.bf16.msra.mxu0 0
        %505 = vmatprep.subr.bf16.mxu0 0
        %506 = vmatpush1.bf16.msra.mxu0 0
        %507 = vmatprep.mubr.bf16.mxu0 0
        %508 = vmatmul.mubr.bf16.gmra.mrb[0].mxu0 %v467
        %v509 = vpop.f32.mrb[0].mxu0
        %v510 = vadd.f32 %v423, %v509
        %v511 = vpop.f32.mrb[0].mxu0
        %v512 = vadd.f32 %v423, %v511
        %v513 = vpop.f32.mrb[0].mxu0
        %v514 = vadd.f32 %v428, %v513
        %v515 = vpop.f32.mrb[0].mxu0
        %v516 = vadd.f32 %v428, %v515
        %517 = vmatprep.mubr.bf16.mxu0 0
        %518 = vmatmul.mubr.bf16.gmra.mrb[0].mxu0 %v470
        %v519 = vpop.f32.mrb[0].mxu0
        %v520 = vadd.f32 %v433, %v519
        %v521 = vpop.f32.mrb[0].mxu0
        %v522 = vadd.f32 %v433, %v521
        %v523 = vpop.f32.mrb[0].mxu0
        %v524 = vadd.f32 %v438, %v523
        %v525 = vpop.f32.mrb[0].mxu0
        %v526 = vadd.f32 %v438, %v525
        %527 = vmatprep.mubr.bf16.mxu0 0
        %528 = vmatmul.mubr.bf16.gmra.mrb[0].mxu0 %v473
        %v529 = vpop.f32.mrb[0].mxu0
        %v530 = vadd.f32 %v443, %v529
        %v531 = vpop.f32.mrb[0].mxu0
        %v532 = vadd.f32 %v443, %v531
        %v533 = vpop.f32.mrb[0].mxu0
        %v534 = vadd.f32 %v448, %v533
        %v535 = vpop.f32.mrb[0].mxu0
        %v536 = vadd.f32 %v448, %v535
        %537 = vdwg.mxu0
        %v538 = vpack.c.bf16 %v514, %v510
        %v539 = vpack.c.bf16 %v516, %v512
        %v540 = vpack.c.bf16 %v524, %v520
        %v541 = vpack.c.bf16 %v526, %v522
        %v542 = vpack.c.bf16 %v534, %v530
        %v543 = vpack.c.bf16 %v536, %v532
        %v544 = vld [vmem:[%s375] sm:$0xff]
        %v545 = vld [vmem:[%s375 + $0x8] sm:$0xff]
        %v548 = vunpack.c.l.b16 %v544
        %v549 = vunpack.c.h.b16 %v544
        %v550 = vunpack.c.l.b16 %v545
        %v551 = vunpack.c.h.b16 %v545
        %v552 = vpack.c.b16 %v550, %v548
        %v553 = vpack.c.b16 %v551, %v549
        %556 = vxpose.xlu0.c.b16.start [1/8] %v552, 128
        %557 = vxpose.xlu0.c.b16.cont [2/8] %v538, 128
        %558 = vxpose.xlu0.c.b16.cont [3/8] 0, 128
        %559 = vxpose.xlu0.c.b16.cont [4/8] 0, 128
        %560 = vxpose.xlu0.c.b16.cont [5/8] 0, 128
        %561 = vxpose.xlu0.c.b16.cont [6/8] 0, 128
        %562 = vxpose.xlu0.c.b16.cont [7/8] 0, 128
        %563 = vxpose.xlu0.c.b16.end [8/8] 0, 128
        %v564 = vpop.trf.xlu0
        %v565 = vpop.trf.xlu0
        %v566 = vpop.trf.xlu0
        %v567 = vpop.trf.xlu0
        %v568 = vpop.trf.xlu0
        %v569 = vpop.trf.xlu0
        %v570 = vpop.trf.xlu0
        %v571 = vpop.trf.xlu0
        %572 = vxpose.xlu0.c.b16.start [1/8] %v553, 128
        %573 = vxpose.xlu0.c.b16.cont [2/8] %v539, 128
        %574 = vxpose.xlu0.c.b16.cont [3/8] 0, 128
        %575 = vxpose.xlu0.c.b16.cont [4/8] 0, 128
        %576 = vxpose.xlu0.c.b16.cont [5/8] 0, 128
        %577 = vxpose.xlu0.c.b16.cont [6/8] 0, 128
        %578 = vxpose.xlu0.c.b16.cont [7/8] 0, 128
        %579 = vxpose.xlu0.c.b16.end [8/8] 0, 128
        %v580 = vpop.trf.xlu0
        %v581 = vpop.trf.xlu0
        %v582 = vpop.trf.xlu0
        %v583 = vpop.trf.xlu0
        %v584 = vpop.trf.xlu0
        %v585 = vpop.trf.xlu0
        %v586 = vpop.trf.xlu0
        %v587 = vpop.trf.xlu0
        %vm588 = vcmask 261120
        %v590 = vsel %vm588, %v564, 0
        %v593 = vsel %vm588, %v565, 0
        %v596 = vsel %vm588, %v566, 0
        %v599 = vsel %vm588, %v567, 0
        %v602 = vsel %vm588, %v568, 0
        %v605 = vsel %vm588, %v569, 0
        %v608 = vsel %vm588, %v570, 0
        %v611 = vsel %vm588, %v571, 0
        %v614 = vsel %vm588, %v580, 0
        %v617 = vsel %vm588, %v581, 0
        %v620 = vsel %vm588, %v582, 0
        %v623 = vsel %vm588, %v583, 0
        %v626 = vsel %vm588, %v584, 0
        %v629 = vsel %vm588, %v585, 0
        %v632 = vsel %vm588, %v586, 0
        %v635 = vsel %vm588, %v587, 0
        %637 = vmatprep.subr.bf16.mxu0 %v539
        %638 = vmatpush1.bf16.msra.mxu0 %v538
        %639 = vmatprep.subr.bf16.mxu0 %v541
        %640 = vmatpush1.bf16.msra.mxu0 %v540
        %641 = vmatprep.subr.bf16.mxu0 0
        %642 = vmatpush1.bf16.msra.mxu0 0
        %643 = vmatprep.subr.bf16.mxu0 0
        %644 = vmatpush1.bf16.msra.mxu0 0
        %645 = vmatprep.subr.bf16.mxu0 0
        %646 = vmatpush1.bf16.msra.mxu0 0
        %647 = vmatprep.subr.bf16.mxu0 0
        %648 = vmatpush1.bf16.msra.mxu0 0
        %649 = vmatprep.subr.bf16.mxu0 0
        %650 = vmatpush1.bf16.msra.mxu0 0
        %651 = vmatprep.subr.bf16.mxu0 0
        %652 = vmatpush1.bf16.msra.mxu0 0
        %653 = vmatprep.subr.bf16.mxu0 0
        %654 = vmatpush1.bf16.msra.mxu0 0
        %655 = vmatprep.subr.bf16.mxu0 0
        %656 = vmatpush1.bf16.msra.mxu0 0
        %657 = vmatprep.subr.bf16.mxu0 0
        %658 = vmatpush1.bf16.msra.mxu0 0
        %659 = vmatprep.subr.bf16.mxu0 0
        %660 = vmatpush1.bf16.msra.mxu0 0
        %661 = vmatprep.subr.bf16.mxu0 0
        %662 = vmatpush1.bf16.msra.mxu0 0
        %663 = vmatprep.subr.bf16.mxu0 0
        %664 = vmatpush1.bf16.msra.mxu0 0
        %665 = vmatprep.subr.bf16.mxu0 0
        %666 = vmatpush1.bf16.msra.mxu0 0
        %667 = vmatprep.subr.bf16.mxu0 0
        %668 = vmatpush1.bf16.msra.mxu0 0
        %669 = vmatprep.mubr.bf16.mxu0 0
        %670 = vmatmul.mubr.bf16.gmra.mrb[0].mxu0 %v590
        %v671 = vpop.f32.mrb[0].mxu0
        %v672 = vadd.f32 0.0, %v671
        %v673 = vpop.f32.mrb[0].mxu0
        %v674 = vadd.f32 0.0, %v673
        %v675 = vpop.f32.mrb[0].mxu0
        %v676 = vadd.f32 0.0, %v675
        %v677 = vpop.f32.mrb[0].mxu0
        %v678 = vadd.f32 0.0, %v677
        %679 = vmatprep.mubr.bf16.mxu0 0
        %680 = vmatmul.mubr.bf16.gmra.mrb[0].mxu0 %v593
        %v681 = vpop.f32.mrb[0].mxu0
        %v682 = vadd.f32 0.0, %v681
        %v683 = vpop.f32.mrb[0].mxu0
        %v684 = vadd.f32 0.0, %v683
        %v685 = vpop.f32.mrb[0].mxu0
        %v686 = vadd.f32 0.0, %v685
        %v687 = vpop.f32.mrb[0].mxu0
        %v688 = vadd.f32 0.0, %v687
        %689 = vmatprep.mubr.bf16.mxu0 0
        %690 = vmatmul.mubr.bf16.gmra.mrb[0].mxu0 %v596
        %v691 = vpop.f32.mrb[0].mxu0
        %v692 = vadd.f32 0.0, %v691
        %v693 = vpop.f32.mrb[0].mxu0
        %v694 = vadd.f32 0.0, %v693
        %v695 = vpop.f32.mrb[0].mxu0
        %v696 = vadd.f32 0.0, %v695
        %v697 = vpop.f32.mrb[0].mxu0
        %v698 = vadd.f32 0.0, %v697
        %699 = vmatprep.mubr.bf16.mxu0 0
        %700 = vmatmul.mubr.bf16.gmra.mrb[0].mxu0 %v599
        %v701 = vpop.f32.mrb[0].mxu0
        %v702 = vadd.f32 0.0, %v701
        %v703 = vpop.f32.mrb[0].mxu0
        %v704 = vadd.f32 0.0, %v703
        %v705 = vpop.f32.mrb[0].mxu0
        %v706 = vadd.f32 0.0, %v705
        %v707 = vpop.f32.mrb[0].mxu0
        %v708 = vadd.f32 0.0, %v707
        %709 = vmatprep.mubr.bf16.mxu0 0
        %710 = vmatmul.mubr.bf16.gmra.mrb[0].mxu0 %v602
        %v711 = vpop.f32.mrb[0].mxu0
        %v712 = vadd.f32 0.0, %v711
        %v713 = vpop.f32.mrb[0].mxu0
        %v714 = vadd.f32 0.0, %v713
        %v715 = vpop.f32.mrb[0].mxu0
        %v716 = vadd.f32 0.0, %v715
        %v717 = vpop.f32.mrb[0].mxu0
        %v718 = vadd.f32 0.0, %v717
        %719 = vmatprep.mubr.bf16.mxu0 0
        %720 = vmatmul.mubr.bf16.gmra.mrb[0].mxu0 %v605
        %v721 = vpop.f32.mrb[0].mxu0
        %v722 = vadd.f32 0.0, %v721
        %v723 = vpop.f32.mrb[0].mxu0
        %v724 = vadd.f32 0.0, %v723
        %v725 = vpop.f32.mrb[0].mxu0
        %v726 = vadd.f32 0.0, %v725
        %v727 = vpop.f32.mrb[0].mxu0
        %v728 = vadd.f32 0.0, %v727
        %729 = vmatprep.mubr.bf16.mxu0 0
        %730 = vmatmul.mubr.bf16.gmra.mrb[0].mxu0 %v608
        %v731 = vpop.f32.mrb[0].mxu0
        %v732 = vadd.f32 0.0, %v731
        %v733 = vpop.f32.mrb[0].mxu0
        %v734 = vadd.f32 0.0, %v733
        %v735 = vpop.f32.mrb[0].mxu0
        %v736 = vadd.f32 0.0, %v735
        %v737 = vpop.f32.mrb[0].mxu0
        %v738 = vadd.f32 0.0, %v737
        %739 = vmatprep.mubr.bf16.mxu0 0
        %740 = vmatmul.mubr.bf16.gmra.mrb[0].mxu0 %v611
        %v741 = vpop.f32.mrb[0].mxu0
        %v742 = vadd.f32 0.0, %v741
        %v743 = vpop.f32.mrb[0].mxu0
        %v744 = vadd.f32 0.0, %v743
        %v745 = vpop.f32.mrb[0].mxu0
        %v746 = vadd.f32 0.0, %v745
        %v747 = vpop.f32.mrb[0].mxu0
        %v748 = vadd.f32 0.0, %v747
        %749 = vmatprep.mubr.bf16.mxu0 0
        %750 = vmatmul.mubr.bf16.gmra.mrb[0].mxu0 %v614
        %v751 = vpop.f32.mrb[0].mxu0
        %v752 = vadd.f32 0.0, %v751
        %v753 = vpop.f32.mrb[0].mxu0
        %v754 = vadd.f32 0.0, %v753
        %v755 = vpop.f32.mrb[0].mxu0
        %v756 = vadd.f32 0.0, %v755
        %v757 = vpop.f32.mrb[0].mxu0
        %v758 = vadd.f32 0.0, %v757
        %759 = vmatprep.mubr.bf16.mxu0 0
        %760 = vmatmul.mubr.bf16.gmra.mrb[0].mxu0 %v617
        %v761 = vpop.f32.mrb[0].mxu0
        %v762 = vadd.f32 0.0, %v761
        %v763 = vpop.f32.mrb[0].mxu0
        %v764 = vadd.f32 0.0, %v763
        %v765 = vpop.f32.mrb[0].mxu0
        %v766 = vadd.f32 0.0, %v765
        %v767 = vpop.f32.mrb[0].mxu0
        %v768 = vadd.f32 0.0, %v767
        %769 = vmatprep.mubr.bf16.mxu0 0
        %770 = vmatmul.mubr.bf16.gmra.mrb[0].mxu0 %v620
        %v771 = vpop.f32.mrb[0].mxu0
        %v772 = vadd.f32 0.0, %v771
        %v773 = vpop.f32.mrb[0].mxu0
        %v774 = vadd.f32 0.0, %v773
        %v775 = vpop.f32.mrb[0].mxu0
        %v776 = vadd.f32 0.0, %v775
        %v777 = vpop.f32.mrb[0].mxu0
        %v778 = vadd.f32 0.0, %v777
        %779 = vmatprep.mubr.bf16.mxu0 0
        %780 = vmatmul.mubr.bf16.gmra.mrb[0].mxu0 %v623
        %v781 = vpop.f32.mrb[0].mxu0
        %v782 = vadd.f32 0.0, %v781
        %v783 = vpop.f32.mrb[0].mxu0
        %v784 = vadd.f32 0.0, %v783
        %v785 = vpop.f32.mrb[0].mxu0
        %v786 = vadd.f32 0.0, %v785
        %v787 = vpop.f32.mrb[0].mxu0
        %v788 = vadd.f32 0.0, %v787
        %789 = vmatprep.mubr.bf16.mxu0 0
        %790 = vmatmul.mubr.bf16.gmra.mrb[0].mxu0 %v626
        %v791 = vpop.f32.mrb[0].mxu0
        %v792 = vadd.f32 0.0, %v791
        %v793 = vpop.f32.mrb[0].mxu0
        %v794 = vadd.f32 0.0, %v793
        %v795 = vpop.f32.mrb[0].mxu0
        %v796 = vadd.f32 0.0, %v795
        %v797 = vpop.f32.mrb[0].mxu0
        %v798 = vadd.f32 0.0, %v797
        %799 = vmatprep.mubr.bf16.mxu0 0
        %800 = vmatmul.mubr.bf16.gmra.mrb[0].mxu0 %v629
        %v801 = vpop.f32.mrb[0].mxu0
        %v802 = vadd.f32 0.0, %v801
        %v803 = vpop.f32.mrb[0].mxu0
        %v804 = vadd.f32 0.0, %v803
        %v805 = vpop.f32.mrb[0].mxu0
        %v806 = vadd.f32 0.0, %v805
        %v807 = vpop.f32.mrb[0].mxu0
        %v808 = vadd.f32 0.0, %v807
        %809 = vmatprep.mubr.bf16.mxu0 0
        %810 = vmatmul.mubr.bf16.gmra.mrb[0].mxu0 %v632
        %v811 = vpop.f32.mrb[0].mxu0
        %v812 = vadd.f32 0.0, %v811
        %v813 = vpop.f32.mrb[0].mxu0
        %v814 = vadd.f32 0.0, %v813
        %v815 = vpop.f32.mrb[0].mxu0
        %v816 = vadd.f32 0.0, %v815
        %v817 = vpop.f32.mrb[0].mxu0
        %v818 = vadd.f32 0.0, %v817
        %819 = vmatprep.mubr.bf16.mxu0 0
        %820 = vmatmul.mubr.bf16.gmra.mrb[0].mxu0 %v635
        %v821 = vpop.f32.mrb[0].mxu0
        %v822 = vadd.f32 0.0, %v821
        %v823 = vpop.f32.mrb[0].mxu0
        %v824 = vadd.f32 0.0, %v823
        %v825 = vpop.f32.mrb[0].mxu0
        %v826 = vadd.f32 0.0, %v825
        %v827 = vpop.f32.mrb[0].mxu0
        %v828 = vadd.f32 0.0, %v827
        %829 = vdwg.mxu0
        %v830 = vmax.f32 %v672, %v674
        %831 = vmax.xlane.f32.xlu0 %v830
        %v832 = vpop.xlane.xlu0 %831
        %v833 = vmax.f32 %v676, %v678
        %834 = vmax.xlane.f32.xlu0 %v833
        %v835 = vpop.xlane.xlu0 %834
        %v836 = vmax.f32 %v682, %v684
        %837 = vmax.xlane.f32.xlu0 %v836
        %v838 = vpop.xlane.xlu0 %837
        %v839 = vmax.f32 %v686, %v688
        %840 = vmax.xlane.f32.xlu0 %v839
        %v841 = vpop.xlane.xlu0 %840
        %v842 = vmax.f32 %v692, %v694
        %843 = vmax.xlane.f32.xlu0 %v842
        %v844 = vpop.xlane.xlu0 %843
        %v845 = vmax.f32 %v696, %v698
        %846 = vmax.xlane.f32.xlu0 %v845
        %v847 = vpop.xlane.xlu0 %846
        %v848 = vmax.f32 %v702, %v704
        %849 = vmax.xlane.f32.xlu0 %v848
        %v850 = vpop.xlane.xlu0 %849
        %v851 = vmax.f32 %v706, %v708
        %852 = vmax.xlane.f32.xlu0 %v851
        %v853 = vpop.xlane.xlu0 %852
        %v854 = vmax.f32 %v712, %v714
        %855 = vmax.xlane.f32.xlu0 %v854
        %v856 = vpop.xlane.xlu0 %855
        %v857 = vmax.f32 %v716, %v718
        %858 = vmax.xlane.f32.xlu0 %v857
        %v859 = vpop.xlane.xlu0 %858
        %v860 = vmax.f32 %v722, %v724
        %861 = vmax.xlane.f32.xlu0 %v860
        %v862 = vpop.xlane.xlu0 %861
        %v863 = vmax.f32 %v726, %v728
        %864 = vmax.xlane.f32.xlu0 %v863
        %v865 = vpop.xlane.xlu0 %864
        %v866 = vmax.f32 %v732, %v734
        %867 = vmax.xlane.f32.xlu0 %v866
        %v868 = vpop.xlane.xlu0 %867
        %v869 = vmax.f32 %v736, %v738
        %870 = vmax.xlane.f32.xlu0 %v869
        %v871 = vpop.xlane.xlu0 %870
        %v872 = vmax.f32 %v742, %v744
        %873 = vmax.xlane.f32.xlu0 %v872
        %v874 = vpop.xlane.xlu0 %873
        %v875 = vmax.f32 %v746, %v748
        %876 = vmax.xlane.f32.xlu0 %v875
        %v877 = vpop.xlane.xlu0 %876
        %v878 = vmax.f32 %v752, %v754
        %879 = vmax.xlane.f32.xlu0 %v878
        %v880 = vpop.xlane.xlu0 %879
        %v881 = vmax.f32 %v756, %v758
        %882 = vmax.xlane.f32.xlu0 %v881
        %v883 = vpop.xlane.xlu0 %882
        %v884 = vmax.f32 %v762, %v764
        %885 = vmax.xlane.f32.xlu0 %v884
        %v886 = vpop.xlane.xlu0 %885
        %v887 = vmax.f32 %v766, %v768
        %888 = vmax.xlane.f32.xlu0 %v887
        %v889 = vpop.xlane.xlu0 %888
        %v890 = vmax.f32 %v772, %v774
        %891 = vmax.xlane.f32.xlu0 %v890
        %v892 = vpop.xlane.xlu0 %891
        %v893 = vmax.f32 %v776, %v778
        %894 = vmax.xlane.f32.xlu0 %v893
        %v895 = vpop.xlane.xlu0 %894
        %v896 = vmax.f32 %v782, %v784
        %897 = vmax.xlane.f32.xlu0 %v896
        %v898 = vpop.xlane.xlu0 %897
        %v899 = vmax.f32 %v786, %v788
        %900 = vmax.xlane.f32.xlu0 %v899
        %v901 = vpop.xlane.xlu0 %900
        %v902 = vmax.f32 %v792, %v794
        %903 = vmax.xlane.f32.xlu0 %v902
        %v904 = vpop.xlane.xlu0 %903
        %v905 = vmax.f32 %v796, %v798
        %906 = vmax.xlane.f32.xlu0 %v905
        %v907 = vpop.xlane.xlu0 %906
        %v908 = vmax.f32 %v802, %v804
        %909 = vmax.xlane.f32.xlu0 %v908
        %v910 = vpop.xlane.xlu0 %909
        %v911 = vmax.f32 %v806, %v808
        %912 = vmax.xlane.f32.xlu0 %v911
        %v913 = vpop.xlane.xlu0 %912
        %v914 = vmax.f32 %v812, %v814
        %915 = vmax.xlane.f32.xlu0 %v914
        %v916 = vpop.xlane.xlu0 %915
        %v917 = vmax.f32 %v816, %v818
        %918 = vmax.xlane.f32.xlu0 %v917
        %v919 = vpop.xlane.xlu0 %918
        %v920 = vmax.f32 %v822, %v824
        %921 = vmax.xlane.f32.xlu0 %v920
        %v922 = vpop.xlane.xlu0 %921
        %v923 = vmax.f32 %v826, %v828
        %924 = vmax.xlane.f32.xlu0 %v923
        %v925 = vpop.xlane.xlu0 %924
        %v926 = vsub.f32 %v672, %v832
        %v927 = vsub.f32 %v674, %v832
        %v928 = vsub.f32 %v676, %v835
        %v929 = vsub.f32 %v678, %v835
        %v930 = vsub.f32 %v682, %v838
        %v931 = vsub.f32 %v684, %v838
        %v932 = vsub.f32 %v686, %v841
        %v933 = vsub.f32 %v688, %v841
        %v934 = vsub.f32 %v692, %v844
        %v935 = vsub.f32 %v694, %v844
        %v936 = vsub.f32 %v696, %v847
        %v937 = vsub.f32 %v698, %v847
        %v938 = vsub.f32 %v702, %v850
        %v939 = vsub.f32 %v704, %v850
        %v940 = vsub.f32 %v706, %v853
        %v941 = vsub.f32 %v708, %v853
        %v942 = vsub.f32 %v712, %v856
        %v943 = vsub.f32 %v714, %v856
        %v944 = vsub.f32 %v716, %v859
        %v945 = vsub.f32 %v718, %v859
        %v946 = vsub.f32 %v722, %v862
        %v947 = vsub.f32 %v724, %v862
        %v948 = vsub.f32 %v726, %v865
        %v949 = vsub.f32 %v728, %v865
        %v950 = vsub.f32 %v732, %v868
        %v951 = vsub.f32 %v734, %v868
        %v952 = vsub.f32 %v736, %v871
        %v953 = vsub.f32 %v738, %v871
        %v954 = vsub.f32 %v742, %v874
        %v955 = vsub.f32 %v744, %v874
        %v956 = vsub.f32 %v746, %v877
        %v957 = vsub.f32 %v748, %v877
        %v958 = vsub.f32 %v752, %v880
        %v959 = vsub.f32 %v754, %v880
        %v960 = vsub.f32 %v756, %v883
        %v961 = vsub.f32 %v758, %v883
        %v962 = vsub.f32 %v762, %v886
        %v963 = vsub.f32 %v764, %v886
        %v964 = vsub.f32 %v766, %v889
        %v965 = vsub.f32 %v768, %v889
        %v966 = vsub.f32 %v772, %v892
        %v967 = vsub.f32 %v774, %v892
        %v968 = vsub.f32 %v776, %v895
        %v969 = vsub.f32 %v778, %v895
        %v970 = vsub.f32 %v782, %v898
        %v971 = vsub.f32 %v784, %v898
        %v972 = vsub.f32 %v786, %v901
        %v973 = vsub.f32 %v788, %v901
        %v974 = vsub.f32 %v792, %v904
        %v975 = vsub.f32 %v794, %v904
        %v976 = vsub.f32 %v796, %v907
        %v977 = vsub.f32 %v798, %v907
        %v978 = vsub.f32 %v802, %v910
        %v979 = vsub.f32 %v804, %v910
        %v980 = vsub.f32 %v806, %v913
        %v981 = vsub.f32 %v808, %v913
        %v982 = vsub.f32 %v812, %v916
        %v983 = vsub.f32 %v814, %v916
        %v984 = vsub.f32 %v816, %v919
        %v985 = vsub.f32 %v818, %v919
        %v986 = vsub.f32 %v822, %v922
        %v987 = vsub.f32 %v824, %v922
        %v988 = vsub.f32 %v826, %v925
        %v989 = vsub.f32 %v828, %v925
        %v990 = vpack.c.bf16 %v928, %v926
        %v991 = vpack.c.bf16 %v929, %v927
        %v992 = vpack.c.bf16 %v932, %v930
        %v993 = vpack.c.bf16 %v933, %v931
        %v994 = vpack.c.bf16 %v936, %v934
        %v995 = vpack.c.bf16 %v937, %v935
        %v996 = vpack.c.bf16 %v940, %v938
        %v997 = vpack.c.bf16 %v941, %v939
        %v998 = vpack.c.bf16 %v944, %v942
        %v999 = vpack.c.bf16 %v945, %v943
        %v1000 = vpack.c.bf16 %v948, %v946
        %v1001 = vpack.c.bf16 %v949, %v947
        %v1002 = vpack.c.bf16 %v952, %v950
        %v1003 = vpack.c.bf16 %v953, %v951
        %v1004 = vpack.c.bf16 %v956, %v954
        %v1005 = vpack.c.bf16 %v957, %v955
        %v1006 = vpack.c.bf16 %v960, %v958
        %v1007 = vpack.c.bf16 %v961, %v959
        %v1008 = vpack.c.bf16 %v964, %v962
        %v1009 = vpack.c.bf16 %v965, %v963
        %v1010 = vpack.c.bf16 %v968, %v966
        %v1011 = vpack.c.bf16 %v969, %v967
        %v1012 = vpack.c.bf16 %v972, %v970
        %v1013 = vpack.c.bf16 %v973, %v971
        %v1014 = vpack.c.bf16 %v976, %v974
        %v1015 = vpack.c.bf16 %v977, %v975
        %v1016 = vpack.c.bf16 %v980, %v978
        %v1017 = vpack.c.bf16 %v981, %v979
        %v1018 = vpack.c.bf16 %v984, %v982
        %v1019 = vpack.c.bf16 %v985, %v983
        %v1020 = vpack.c.bf16 %v988, %v986
        %v1021 = vpack.c.bf16 %v989, %v987
        %v1023 = vmul.bf16 %v990, 1069105081
        %v1024 = vpow.bf16.pop %v1023
        %v1026 = vmul.bf16 %v991, 1069105081
        %v1027 = vpow.bf16.pop %v1026
        %v1029 = vmul.bf16 %v992, 1069105081
        %v1030 = vpow.bf16.pop %v1029
        %v1032 = vmul.bf16 %v993, 1069105081
        %v1033 = vpow.bf16.pop %v1032
        %v1035 = vmul.bf16 %v994, 1069105081
        %v1036 = vpow.bf16.pop %v1035
        %v1038 = vmul.bf16 %v995, 1069105081
        %v1039 = vpow.bf16.pop %v1038
        %v1041 = vmul.bf16 %v996, 1069105081
        %v1042 = vpow.bf16.pop %v1041
        %v1044 = vmul.bf16 %v997, 1069105081
        %v1045 = vpow.bf16.pop %v1044
        %v1047 = vmul.bf16 %v998, 1069105081
        %v1048 = vpow.bf16.pop %v1047
        %v1050 = vmul.bf16 %v999, 1069105081
        %v1051 = vpow.bf16.pop %v1050
        %v1053 = vmul.bf16 %v1000, 1069105081
        %v1054 = vpow.bf16.pop %v1053
        %v1056 = vmul.bf16 %v1001, 1069105081
        %v1057 = vpow.bf16.pop %v1056
        %v1059 = vmul.bf16 %v1002, 1069105081
        %v1060 = vpow.bf16.pop %v1059
        %v1062 = vmul.bf16 %v1003, 1069105081
        %v1063 = vpow.bf16.pop %v1062
        %v1065 = vmul.bf16 %v1004, 1069105081
        %v1066 = vpow.bf16.pop %v1065
        %v1068 = vmul.bf16 %v1005, 1069105081
        %v1069 = vpow.bf16.pop %v1068
        %v1071 = vmul.bf16 %v1006, 1069105081
        %v1072 = vpow.bf16.pop %v1071
        %v1074 = vmul.bf16 %v1007, 1069105081
        %v1075 = vpow.bf16.pop %v1074
        %v1077 = vmul.bf16 %v1008, 1069105081
        %v1078 = vpow.bf16.pop %v1077
        %v1080 = vmul.bf16 %v1009, 1069105081
        %v1081 = vpow.bf16.pop %v1080
        %v1083 = vmul.bf16 %v1010, 1069105081
        %v1084 = vpow.bf16.pop %v1083
        %v1086 = vmul.bf16 %v1011, 1069105081
        %v1087 = vpow.bf16.pop %v1086
        %v1089 = vmul.bf16 %v1012, 1069105081
        %v1090 = vpow.bf16.pop %v1089
        %v1092 = vmul.bf16 %v1013, 1069105081
        %v1093 = vpow.bf16.pop %v1092
        %v1095 = vmul.bf16 %v1014, 1069105081
        %v1096 = vpow.bf16.pop %v1095
        %v1098 = vmul.bf16 %v1015, 1069105081
        %v1099 = vpow.bf16.pop %v1098
        %v1101 = vmul.bf16 %v1016, 1069105081
        %v1102 = vpow.bf16.pop %v1101
        %v1104 = vmul.bf16 %v1017, 1069105081
        %v1105 = vpow.bf16.pop %v1104
        %v1107 = vmul.bf16 %v1018, 1069105081
        %v1108 = vpow.bf16.pop %v1107
        %v1110 = vmul.bf16 %v1019, 1069105081
        %v1111 = vpow.bf16.pop %v1110
        %v1113 = vmul.bf16 %v1020, 1069105081
        %v1114 = vpow.bf16.pop %v1113
        %v1116 = vmul.bf16 %v1021, 1069105081
        %v1117 = vpow.bf16.pop %v1116
        %v1118 = vunpack.c.l.bf16 %v1024
        %v1119 = vunpack.c.l.bf16 %v1027
        %v1120 = vunpack.c.h.bf16 %v1024
        %v1121 = vunpack.c.h.bf16 %v1027
        %v1122 = vunpack.c.l.bf16 %v1030
        %v1123 = vunpack.c.l.bf16 %v1033
        %v1124 = vunpack.c.h.bf16 %v1030
        %v1125 = vunpack.c.h.bf16 %v1033
        %v1126 = vunpack.c.l.bf16 %v1036
        %v1127 = vunpack.c.l.bf16 %v1039
        %v1128 = vunpack.c.h.bf16 %v1036
        %v1129 = vunpack.c.h.bf16 %v1039
        %v1130 = vunpack.c.l.bf16 %v1042
        %v1131 = vunpack.c.l.bf16 %v1045
        %v1132 = vunpack.c.h.bf16 %v1042
        %v1133 = vunpack.c.h.bf16 %v1045
        %v1134 = vunpack.c.l.bf16 %v1048
        %v1135 = vunpack.c.l.bf16 %v1051
        %v1136 = vunpack.c.h.bf16 %v1048
        %v1137 = vunpack.c.h.bf16 %v1051
        %v1138 = vunpack.c.l.bf16 %v1054
        %v1139 = vunpack.c.l.bf16 %v1057
        %v1140 = vunpack.c.h.bf16 %v1054
        %v1141 = vunpack.c.h.bf16 %v1057
        %v1142 = vunpack.c.l.bf16 %v1060
        %v1143 = vunpack.c.l.bf16 %v1063
        %v1144 = vunpack.c.h.bf16 %v1060
        %v1145 = vunpack.c.h.bf16 %v1063
        %v1146 = vunpack.c.l.bf16 %v1066
        %v1147 = vunpack.c.l.bf16 %v1069
        %v1148 = vunpack.c.h.bf16 %v1066
        %v1149 = vunpack.c.h.bf16 %v1069
        %v1150 = vunpack.c.l.bf16 %v1072
        %v1151 = vunpack.c.l.bf16 %v1075
        %v1152 = vunpack.c.h.bf16 %v1072
        %v1153 = vunpack.c.h.bf16 %v1075
        %v1154 = vunpack.c.l.bf16 %v1078
        %v1155 = vunpack.c.l.bf16 %v1081
        %v1156 = vunpack.c.h.bf16 %v1078
        %v1157 = vunpack.c.h.bf16 %v1081
        %v1158 = vunpack.c.l.bf16 %v1084
        %v1159 = vunpack.c.l.bf16 %v1087
        %v1160 = vunpack.c.h.bf16 %v1084
        %v1161 = vunpack.c.h.bf16 %v1087
        %v1162 = vunpack.c.l.bf16 %v1090
        %v1163 = vunpack.c.l.bf16 %v1093
        %v1164 = vunpack.c.h.bf16 %v1090
        %v1165 = vunpack.c.h.bf16 %v1093
        %v1166 = vunpack.c.l.bf16 %v1096
        %v1167 = vunpack.c.l.bf16 %v1099
        %v1168 = vunpack.c.h.bf16 %v1096
        %v1169 = vunpack.c.h.bf16 %v1099
        %v1170 = vunpack.c.l.bf16 %v1102
        %v1171 = vunpack.c.l.bf16 %v1105
        %v1172 = vunpack.c.h.bf16 %v1102
        %v1173 = vunpack.c.h.bf16 %v1105
        %v1174 = vunpack.c.l.bf16 %v1108
        %v1175 = vunpack.c.l.bf16 %v1111
        %v1176 = vunpack.c.h.bf16 %v1108
        %v1177 = vunpack.c.h.bf16 %v1111
        %v1178 = vunpack.c.l.bf16 %v1114
        %v1179 = vunpack.c.l.bf16 %v1117
        %v1180 = vunpack.c.h.bf16 %v1114
        %v1181 = vunpack.c.h.bf16 %v1117
        %v1182 = vadd.f32 %v1118, %v1119
        %1183 = vadd.xlane.f32.xlu0 %v1182
        %v1184 = vpop.xlane.xlu0 %1183
        %v1185 = vadd.f32 %v1120, %v1121
        %1186 = vadd.xlane.f32.xlu0 %v1185
        %v1187 = vpop.xlane.xlu0 %1186
        %v1188 = vadd.f32 %v1122, %v1123
        %1189 = vadd.xlane.f32.xlu0 %v1188
        %v1190 = vpop.xlane.xlu0 %1189
        %v1191 = vadd.f32 %v1124, %v1125
        %1192 = vadd.xlane.f32.xlu0 %v1191
        %v1193 = vpop.xlane.xlu0 %1192
        %v1194 = vadd.f32 %v1126, %v1127
        %1195 = vadd.xlane.f32.xlu0 %v1194
        %v1196 = vpop.xlane.xlu0 %1195
        %v1197 = vadd.f32 %v1128, %v1129
        %1198 = vadd.xlane.f32.xlu0 %v1197
        %v1199 = vpop.xlane.xlu0 %1198
        %v1200 = vadd.f32 %v1130, %v1131
        %1201 = vadd.xlane.f32.xlu0 %v1200
        %v1202 = vpop.xlane.xlu0 %1201
        %v1203 = vadd.f32 %v1132, %v1133
        %1204 = vadd.xlane.f32.xlu0 %v1203
        %v1205 = vpop.xlane.xlu0 %1204
        %v1206 = vadd.f32 %v1134, %v1135
        %1207 = vadd.xlane.f32.xlu0 %v1206
        %v1208 = vpop.xlane.xlu0 %1207
        %v1209 = vadd.f32 %v1136, %v1137
        %1210 = vadd.xlane.f32.xlu0 %v1209
        %v1211 = vpop.xlane.xlu0 %1210
        %v1212 = vadd.f32 %v1138, %v1139
        %1213 = vadd.xlane.f32.xlu0 %v1212
        %v1214 = vpop.xlane.xlu0 %1213
        %v1215 = vadd.f32 %v1140, %v1141
        %1216 = vadd.xlane.f32.xlu0 %v1215
        %v1217 = vpop.xlane.xlu0 %1216
        %v1218 = vadd.f32 %v1142, %v1143
        %1219 = vadd.xlane.f32.xlu0 %v1218
        %v1220 = vpop.xlane.xlu0 %1219
        %v1221 = vadd.f32 %v1144, %v1145
        %1222 = vadd.xlane.f32.xlu0 %v1221
        %v1223 = vpop.xlane.xlu0 %1222
        %v1224 = vadd.f32 %v1146, %v1147
        %1225 = vadd.xlane.f32.xlu0 %v1224
        %v1226 = vpop.xlane.xlu0 %1225
        %v1227 = vadd.f32 %v1148, %v1149
        %1228 = vadd.xlane.f32.xlu0 %v1227
        %v1229 = vpop.xlane.xlu0 %1228
        %v1230 = vadd.f32 %v1150, %v1151
        %1231 = vadd.xlane.f32.xlu0 %v1230
        %v1232 = vpop.xlane.xlu0 %1231
        %v1233 = vadd.f32 %v1152, %v1153
        %1234 = vadd.xlane.f32.xlu0 %v1233
        %v1235 = vpop.xlane.xlu0 %1234
        %v1236 = vadd.f32 %v1154, %v1155
        %1237 = vadd.xlane.f32.xlu0 %v1236
        %v1238 = vpop.xlane.xlu0 %1237
        %v1239 = vadd.f32 %v1156, %v1157
        %1240 = vadd.xlane.f32.xlu0 %v1239
        %v1241 = vpop.xlane.xlu0 %1240
        %v1242 = vadd.f32 %v1158, %v1159
        %1243 = vadd.xlane.f32.xlu0 %v1242
        %v1244 = vpop.xlane.xlu0 %1243
        %v1245 = vadd.f32 %v1160, %v1161
        %1246 = vadd.xlane.f32.xlu0 %v1245
        %v1247 = vpop.xlane.xlu0 %1246
        %v1248 = vadd.f32 %v1162, %v1163
        %1249 = vadd.xlane.f32.xlu0 %v1248
        %v1250 = vpop.xlane.xlu0 %1249
        %v1251 = vadd.f32 %v1164, %v1165
        %1252 = vadd.xlane.f32.xlu0 %v1251
        %v1253 = vpop.xlane.xlu0 %1252
        %v1254 = vadd.f32 %v1166, %v1167
        %1255 = vadd.xlane.f32.xlu0 %v1254
        %v1256 = vpop.xlane.xlu0 %1255
        %v1257 = vadd.f32 %v1168, %v1169
        %1258 = vadd.xlane.f32.xlu0 %v1257
        %v1259 = vpop.xlane.xlu0 %1258
        %v1260 = vadd.f32 %v1170, %v1171
        %1261 = vadd.xlane.f32.xlu0 %v1260
        %v1262 = vpop.xlane.xlu0 %1261
        %v1263 = vadd.f32 %v1172, %v1173
        %1264 = vadd.xlane.f32.xlu0 %v1263
        %v1265 = vpop.xlane.xlu0 %1264
        %v1266 = vadd.f32 %v1174, %v1175
        %1267 = vadd.xlane.f32.xlu0 %v1266
        %v1268 = vpop.xlane.xlu0 %1267
        %v1269 = vadd.f32 %v1176, %v1177
        %1270 = vadd.xlane.f32.xlu0 %v1269
        %v1271 = vpop.xlane.xlu0 %1270
        %v1272 = vadd.f32 %v1178, %v1179
        %1273 = vadd.xlane.f32.xlu0 %v1272
        %v1274 = vpop.xlane.xlu0 %1273
        %v1275 = vadd.f32 %v1180, %v1181
        %1276 = vadd.xlane.f32.xlu0 %v1275
        %v1277 = vpop.xlane.xlu0 %1276
        %v1278 = vrcp.pop %v1184
        %v1279 = vrcp.pop %v1187
        %v1280 = vrcp.pop %v1190
        %v1281 = vrcp.pop %v1193
        %v1282 = vrcp.pop %v1196
        %v1283 = vrcp.pop %v1199
        %v1284 = vrcp.pop %v1202
        %v1285 = vrcp.pop %v1205
        %v1286 = vrcp.pop %v1208
        %v1287 = vrcp.pop %v1211
        %v1288 = vrcp.pop %v1214
        %v1289 = vrcp.pop %v1217
        %v1290 = vrcp.pop %v1220
        %v1291 = vrcp.pop %v1223
        %v1292 = vrcp.pop %v1226
        %v1293 = vrcp.pop %v1229
        %v1294 = vrcp.pop %v1232
        %v1295 = vrcp.pop %v1235
        %v1296 = vrcp.pop %v1238
        %v1297 = vrcp.pop %v1241
        %v1298 = vrcp.pop %v1244
        %v1299 = vrcp.pop %v1247
        %v1300 = vrcp.pop %v1250
        %v1301 = vrcp.pop %v1253
        %v1302 = vrcp.pop %v1256
        %v1303 = vrcp.pop %v1259
        %v1304 = vrcp.pop %v1262
        %v1305 = vrcp.pop %v1265
        %v1306 = vrcp.pop %v1268
        %v1307 = vrcp.pop %v1271
        %v1308 = vrcp.pop %v1274
        %v1309 = vrcp.pop %v1277
        %v1310 = vpack.c.bf16 %v1279, %v1278
        %v1311 = vpack.c.bf16 %v1281, %v1280
        %v1312 = vpack.c.bf16 %v1283, %v1282
        %v1313 = vpack.c.bf16 %v1285, %v1284
        %v1314 = vpack.c.bf16 %v1287, %v1286
        %v1315 = vpack.c.bf16 %v1289, %v1288
        %v1316 = vpack.c.bf16 %v1291, %v1290
        %v1317 = vpack.c.bf16 %v1293, %v1292
        %v1318 = vpack.c.bf16 %v1295, %v1294
        %v1319 = vpack.c.bf16 %v1297, %v1296
        %v1320 = vpack.c.bf16 %v1299, %v1298
        %v1321 = vpack.c.bf16 %v1301, %v1300
        %v1322 = vpack.c.bf16 %v1303, %v1302
        %v1323 = vpack.c.bf16 %v1305, %v1304
        %v1324 = vpack.c.bf16 %v1307, %v1306
        %v1325 = vpack.c.bf16 %v1309, %v1308
        %v1326 = vmul.bf16 %v1024, %v1310
        %v1327 = vmul.bf16 %v1027, %v1310
        %v1328 = vmul.bf16 %v1030, %v1311
        %v1329 = vmul.bf16 %v1033, %v1311
        %v1330 = vmul.bf16 %v1036, %v1312
        %v1331 = vmul.bf16 %v1039, %v1312
        %v1332 = vmul.bf16 %v1042, %v1313
        %v1333 = vmul.bf16 %v1045, %v1313
        %v1334 = vmul.bf16 %v1048, %v1314
        %v1335 = vmul.bf16 %v1051, %v1314
        %v1336 = vmul.bf16 %v1054, %v1315
        %v1337 = vmul.bf16 %v1057, %v1315
        %v1338 = vmul.bf16 %v1060, %v1316
        %v1339 = vmul.bf16 %v1063, %v1316
        %v1340 = vmul.bf16 %v1066, %v1317
        %v1341 = vmul.bf16 %v1069, %v1317
        %v1342 = vmul.bf16 %v1072, %v1318
        %v1343 = vmul.bf16 %v1075, %v1318
        %v1344 = vmul.bf16 %v1078, %v1319
        %v1345 = vmul.bf16 %v1081, %v1319
        %v1346 = vmul.bf16 %v1084, %v1320
        %v1347 = vmul.bf16 %v1087, %v1320
        %v1348 = vmul.bf16 %v1090, %v1321
        %v1349 = vmul.bf16 %v1093, %v1321
        %v1350 = vmul.bf16 %v1096, %v1322
        %v1351 = vmul.bf16 %v1099, %v1322
        %v1352 = vmul.bf16 %v1102, %v1323
        %v1353 = vmul.bf16 %v1105, %v1323
        %v1354 = vmul.bf16 %v1108, %v1324
        %v1355 = vmul.bf16 %v1111, %v1324
        %v1356 = vmul.bf16 %v1114, %v1325
        %v1357 = vmul.bf16 %v1117, %v1325
        %1358 = vmatprep.subr.bf16.mxu0 %v1327
        %1359 = vmatpush1.bf16.xpose.msra.mxu0 %v1326
        %1360 = vmatprep.subr.bf16.mxu0 %v1329
        %1361 = vmatpush1.bf16.xpose.msra.mxu0 %v1328
        %1362 = vmatprep.subr.bf16.mxu0 %v1331
        %1363 = vmatpush1.bf16.xpose.msra.mxu0 %v1330
        %1364 = vmatprep.subr.bf16.mxu0 %v1333
        %1365 = vmatpush1.bf16.xpose.msra.mxu0 %v1332
        %1366 = vmatprep.subr.bf16.mxu0 %v1335
        %1367 = vmatpush1.bf16.xpose.msra.mxu0 %v1334
        %1368 = vmatprep.subr.bf16.mxu0 %v1337
        %1369 = vmatpush1.bf16.xpose.msra.mxu0 %v1336
        %1370 = vmatprep.subr.bf16.mxu0 %v1339
        %1371 = vmatpush1.bf16.xpose.msra.mxu0 %v1338
        %1372 = vmatprep.subr.bf16.mxu0 %v1341
        %1373 = vmatpush1.bf16.xpose.msra.mxu0 %v1340
        %1374 = vmatprep.subr.bf16.mxu0 %v1343
        %1375 = vmatpush1.bf16.xpose.msra.mxu0 %v1342
        %1376 = vmatprep.subr.bf16.mxu0 %v1345
        %1377 = vmatpush1.bf16.xpose.msra.mxu0 %v1344
        %1378 = vmatprep.subr.bf16.mxu0 %v1347
        %1379 = vmatpush1.bf16.xpose.msra.mxu0 %v1346
        %1380 = vmatprep.subr.bf16.mxu0 %v1349
        %1381 = vmatpush1.bf16.xpose.msra.mxu0 %v1348
        %1382 = vmatprep.subr.bf16.mxu0 %v1351
        %1383 = vmatpush1.bf16.xpose.msra.mxu0 %v1350
        %1384 = vmatprep.subr.bf16.mxu0 %v1353
        %1385 = vmatpush1.bf16.xpose.msra.mxu0 %v1352
        %1386 = vmatprep.subr.bf16.mxu0 %v1355
        %1387 = vmatpush1.bf16.xpose.msra.mxu0 %v1354
        %1388 = vmatprep.subr.bf16.mxu0 %v1357
        %1389 = vmatpush1.bf16.xpose.msra.mxu0 %v1356
        %1390 = vmatprep.mubr.bf16.mxu0 %v543
        %1391 = vmatmul.mubr.bf16.gmra.mrb[0].mxu0 %v542
        %v1392 = vpop.f32.mrb[0].mxu0
        %v1393 = vadd.f32 0.0, %v1392
        %v1394 = vpop.f32.mrb[0].mxu0
        %v1395 = vadd.f32 0.0, %v1394
        %v1396 = vpop.f32.mrb[0].mxu0
        %v1397 = vadd.f32 0.0, %v1396
        %v1398 = vpop.f32.mrb[0].mxu0
        %v1399 = vadd.f32 0.0, %v1398
        %1400 = vdwg.mxu0
        %s1401 = smul.u32 %s31, 16
        %s1402 = sshra.s32 %s1401, 3
        %s1403 = sand.u32 %s1401, 7
        %s1404 = smul.u32 %s1402, 2
        %s1405 = smul.addr %s1404, 8
        %s1406 = scalar_lea.vmem [#allocation2], %s1405
        %1407 = vst [vmem:[%s1406] sm:$0xff] %v1393
        %1408 = vst [vmem:[%s1406 + $0x8] sm:$0xff] %v1395
        %1409 = vst [vmem:[%s1406 + $0x10] sm:$0xff] %v1397
        %1410 = vst [vmem:[%s1406 + $0x18] sm:$0xff] %v1399
        %v1411 = vld [vmem:[#allocation3] sm:$0x1]
        %v1412 = vadd.f32 %v1393, %v1395
        %v1413 = vadd.f32 %v1412, %v1397
        %v1414 = vadd.f32 %v1413, %v1399
        %1415 = vadd.xlane.f32.xlu0 %v1414
        %v1416 = vpop.xlane.xlu0 %1415
        %v1417 = vrot.slane %v1416, 4
        %v1418 = vadd.f32 %v1416, %v1417
        %v1419 = vrot.slane %v1418, 2
        %v1420 = vadd.f32 %v1418, %v1419
        %v1421 = vrot.slane %v1420, 1
        %v1422 = vadd.f32 %v1420, %v1421
        %s1423 = vtos %v1422
        %v1424 = vstv %s1423
        %v1425 = vadd.f32 %v1411, %v1424
        %vm1426 = vcmask 0
        %1427 = vst.msk [vmem:[#allocation3] sm:$0x1] %vm1426, %v1425
        %v1428 = vld [vmem:[#allocation4] sm:$0x1]
        %v1429 = vmul.f32 %v1393, %v1393
        %v1430 = vmul.f32 %v1395, %v1395
        %v1431 = vmul.f32 %v1397, %v1397
        %v1432 = vmul.f32 %v1399, %v1399
        %v1433 = vadd.f32 %v1429, %v1430
        %v1434 = vadd.f32 %v1433, %v1431
        %v1435 = vadd.f32 %v1434, %v1432
        %1436 = vadd.xlane.f32.xlu0 %v1435
        %v1437 = vpop.xlane.xlu0 %1436
        %v1438 = vrot.slane %v1437, 4
        %v1439 = vadd.f32 %v1437, %v1438
        %v1440 = vrot.slane %v1439, 2
        %v1441 = vadd.f32 %v1439, %v1440
        %v1442 = vrot.slane %v1441, 1
        %v1443 = vadd.f32 %v1441, %v1442
        %s1444 = vtos %v1443
        %v1445 = vstv %s1444
        %v1446 = vadd.f32 %v1428, %v1445
        %1447 = vst.msk [vmem:[#allocation4] sm:$0x1] %vm1426, %v1446
        %p1448 = scmp.eq.s32.totalorder %s31, 3
        // Predicated region
        $region61: #{tpu_custom_call.1} parent=43 // pred_check
          %p1449 = pneg %p1448
        $region62: #{tpu_custom_call.1} parent=43 // pred_check_branch
          %1451 = sbr.rel (%p1449) target = $region64
        $region63: #{tpu_custom_call.1} parent=43 // pred_region
          %v1452 = vld [vmem:[#allocation2] sm:$0xff]
          %v1453 = vld [vmem:[#allocation2 + $0x8] sm:$0xff]
          %v1454 = vld [vmem:[#allocation2 + $0x10] sm:$0xff]
          %v1455 = vld [vmem:[#allocation2 + $0x18] sm:$0xff]
          %v1456 = vld [vmem:[#allocation2 + $0x20] sm:$0xff]
          %v1457 = vld [vmem:[#allocation2 + $0x28] sm:$0xff]
          %v1458 = vld [vmem:[#allocation2 + $0x30] sm:$0xff]
          %v1459 = vld [vmem:[#allocation2 + $0x38] sm:$0xff]
          %v1460 = vld [vmem:[#allocation2 + $0x40] sm:$0xff]
          %v1461 = vld [vmem:[#allocation2 + $0x48] sm:$0xff]
          %v1462 = vld [vmem:[#allocation2 + $0x50] sm:$0xff]
          %v1463 = vld [vmem:[#allocation2 + $0x58] sm:$0xff]
          %v1464 = vld [vmem:[#allocation2 + $0x60] sm:$0xff]
          %v1465 = vld [vmem:[#allocation2 + $0x68] sm:$0xff]
          %v1466 = vld [vmem:[#allocation2 + $0x70] sm:$0xff]
          %v1467 = vld [vmem:[#allocation2 + $0x78] sm:$0xff]
          %v1468 = vld [vmem:[#allocation3] sm:$0x1]
          %v1469 = vmul.f32 %v1468, 6.1035156e-05
          %v1470 = vld [vmem:[#allocation4] sm:$0x1]
          %v1471 = vmul.f32 %v1470, 6.1035156e-05
          %v1472 = vmul.f32 %v1469, %v1469
          %v1473 = vsub.f32 %v1471, %v1472
          %v1475 = vlaneseq
          %v1476 = vshrl.u32 %v1475, 7
          %v1477 = vsub.s32 0, %v1476
          %v1478 = vrot.slane %v1469, %v1477
          %1479 = vset.pattern.permute.xlu0 0
          %1480 = vperm.xlu0 %1479, %v1478
          %v1481 = vpop.permute.xlu0 %1480
          %v1483 = vsub.f32 %v1452, %v1481
          %v1484 = vsub.f32 %v1453, %v1481
          %v1485 = vsub.f32 %v1454, %v1481
          %v1486 = vsub.f32 %v1455, %v1481
          %v1487 = vsub.f32 %v1456, %v1481
          %v1488 = vsub.f32 %v1457, %v1481
          %v1489 = vsub.f32 %v1458, %v1481
          %v1490 = vsub.f32 %v1459, %v1481
          %v1491 = vsub.f32 %v1460, %v1481
          %v1492 = vsub.f32 %v1461, %v1481
          %v1493 = vsub.f32 %v1462, %v1481
          %v1494 = vsub.f32 %v1463, %v1481
          %v1495 = vsub.f32 %v1464, %v1481
          %v1496 = vsub.f32 %v1465, %v1481
          %v1497 = vsub.f32 %v1466, %v1481
          %v1498 = vsub.f32 %v1467, %v1481
          %v1499 = vadd.f32 %v1473, 1e-05
          %v1500 = vrsqrt.pop %v1499
          %v1502 = vlaneseq
          %v1503 = vshrl.u32 %v1502, 7
          %v1504 = vsub.s32 0, %v1503
          %v1505 = vrot.slane %v1500, %v1504
          %1506 = vset.pattern.permute.xlu0 0
          %1507 = vperm.xlu0 %1506, %v1505
          %v1508 = vpop.permute.xlu0 %1507
          %v1510 = vmul.f32 %v1483, %v1508
          %v1511 = vmul.f32 %v1484, %v1508
          %v1512 = vmul.f32 %v1485, %v1508
          %v1513 = vmul.f32 %v1486, %v1508
          %v1514 = vmul.f32 %v1487, %v1508
          %v1515 = vmul.f32 %v1488, %v1508
          %v1516 = vmul.f32 %v1489, %v1508
          %v1517 = vmul.f32 %v1490, %v1508
          %v1518 = vmul.f32 %v1491, %v1508
          %v1519 = vmul.f32 %v1492, %v1508
          %v1520 = vmul.f32 %v1493, %v1508
          %v1521 = vmul.f32 %v1494, %v1508
          %v1522 = vmul.f32 %v1495, %v1508
          %v1523 = vmul.f32 %v1496, %v1508
          %v1524 = vmul.f32 %v1497, %v1508
          %v1525 = vmul.f32 %v1498, %v1508
          %v1526 = vld [vmem:[%s4] sm:$0xff]
          %v1527 = vld [vmem:[%s4 + $0x8] sm:$0xff]
          %v1528 = vld [vmem:[%s4 + $0x10] sm:$0xff]
          %v1529 = vld [vmem:[%s4 + $0x18] sm:$0xff]
          %v1530 = vld [vmem:[%s4 + $0x20] sm:$0xff]
          %v1531 = vld [vmem:[%s4 + $0x28] sm:$0xff]
          %v1532 = vld [vmem:[%s4 + $0x30] sm:$0xff]
          %v1533 = vld [vmem:[%s4 + $0x38] sm:$0xff]
          %v1534 = vld [vmem:[%s4 + $0x40] sm:$0xff]
          %v1535 = vld [vmem:[%s4 + $0x48] sm:$0xff]
          %v1536 = vld [vmem:[%s4 + $0x50] sm:$0xff]
          %v1537 = vld [vmem:[%s4 + $0x58] sm:$0xff]
          %v1538 = vld [vmem:[%s4 + $0x60] sm:$0xff]
          %v1539 = vld [vmem:[%s4 + $0x68] sm:$0xff]
          %v1540 = vld [vmem:[%s4 + $0x70] sm:$0xff]
          %v1541 = vld [vmem:[%s4 + $0x78] sm:$0xff]
          %v1542 = vmul.f32 %v1510, %v1526
          %v1543 = vmul.f32 %v1511, %v1527
          %v1544 = vmul.f32 %v1512, %v1528
          %v1545 = vmul.f32 %v1513, %v1529
          %v1546 = vmul.f32 %v1514, %v1530
          %v1547 = vmul.f32 %v1515, %v1531
          %v1548 = vmul.f32 %v1516, %v1532
          %v1549 = vmul.f32 %v1517, %v1533
          %v1550 = vmul.f32 %v1518, %v1534
          %v1551 = vmul.f32 %v1519, %v1535
          %v1552 = vmul.f32 %v1520, %v1536
          %v1553 = vmul.f32 %v1521, %v1537
          %v1554 = vmul.f32 %v1522, %v1538
          %v1555 = vmul.f32 %v1523, %v1539
          %v1556 = vmul.f32 %v1524, %v1540
          %v1557 = vmul.f32 %v1525, %v1541
          %v1558 = vld [vmem:[#allocation10] sm:$0xff]
          %v1559 = vld [vmem:[#allocation10 + $0x8] sm:$0xff]
          %v1560 = vld [vmem:[#allocation10 + $0x10] sm:$0xff]
          %v1561 = vld [vmem:[#allocation10 + $0x18] sm:$0xff]
          %v1562 = vld [vmem:[#allocation10 + $0x20] sm:$0xff]
          %v1563 = vld [vmem:[#allocation10 + $0x28] sm:$0xff]
          %v1564 = vld [vmem:[#allocation10 + $0x30] sm:$0xff]
          %v1565 = vld [vmem:[#allocation10 + $0x38] sm:$0xff]
          %v1566 = vld [vmem:[#allocation10 + $0x40] sm:$0xff]
          %v1567 = vld [vmem:[#allocation10 + $0x48] sm:$0xff]
          %v1568 = vld [vmem:[#allocation10 + $0x50] sm:$0xff]
          %v1569 = vld [vmem:[#allocation10 + $0x58] sm:$0xff]
          %v1570 = vld [vmem:[#allocation10 + $0x60] sm:$0xff]
          %v1571 = vld [vmem:[#allocation10 + $0x68] sm:$0xff]
          %v1572 = vld [vmem:[#allocation10 + $0x70] sm:$0xff]
          %v1573 = vld [vmem:[#allocation10 + $0x78] sm:$0xff]
          %v1574 = vadd.f32 %v1542, %v1558
          %v1575 = vadd.f32 %v1543, %v1559
          %v1576 = vadd.f32 %v1544, %v1560
          %v1577 = vadd.f32 %v1545, %v1561
          %v1578 = vadd.f32 %v1546, %v1562
          %v1579 = vadd.f32 %v1547, %v1563
          %v1580 = vadd.f32 %v1548, %v1564
          %v1581 = vadd.f32 %v1549, %v1565
          %v1582 = vadd.f32 %v1550, %v1566
          %v1583 = vadd.f32 %v1551, %v1567
          %v1584 = vadd.f32 %v1552, %v1568
          %v1585 = vadd.f32 %v1553, %v1569
          %v1586 = vadd.f32 %v1554, %v1570
          %v1587 = vadd.f32 %v1555, %v1571
          %v1588 = vadd.f32 %v1556, %v1572
          %v1589 = vadd.f32 %v1557, %v1573
          %v1590 = vadd.f32 %v1574, %v377
          %v1591 = vadd.f32 %v1575, %v378
          %v1592 = vadd.f32 %v1576, %v379
          %v1593 = vadd.f32 %v1577, %v380
          %v1594 = vadd.f32 %v1578, %v381
          %v1595 = vadd.f32 %v1579, %v382
          %v1596 = vadd.f32 %v1580, %v383
          %v1597 = vadd.f32 %v1581, %v384
          %v1598 = vadd.f32 %v1582, %v385
          %v1599 = vadd.f32 %v1583, %v386
          %v1600 = vadd.f32 %v1584, %v387
          %v1601 = vadd.f32 %v1585, %v388
          %v1602 = vadd.f32 %v1586, %v389
          %v1603 = vadd.f32 %v1587, %v390
          %v1604 = vadd.f32 %v1588, %v391
          %v1605 = vadd.f32 %v1589, %v392
          %1606 = vst [vmem:[%s365] sm:$0xff] %v1590
          %1607 = vst [vmem:[%s365 + $0x8] sm:$0xff] %v1591
          %1608 = vst [vmem:[%s365 + $0x10] sm:$0xff] %v1592
          %1609 = vst [vmem:[%s365 + $0x18] sm:$0xff] %v1593
          %1610 = vst [vmem:[%s365 + $0x20] sm:$0xff] %v1594
          %1611 = vst [vmem:[%s365 + $0x28] sm:$0xff] %v1595
          %1612 = vst [vmem:[%s365 + $0x30] sm:$0xff] %v1596
          %1613 = vst [vmem:[%s365 + $0x38] sm:$0xff] %v1597
          %1614 = vst [vmem:[%s365 + $0x40] sm:$0xff] %v1598
          %1615 = vst [vmem:[%s365 + $0x48] sm:$0xff] %v1599
          %1616 = vst [vmem:[%s365 + $0x50] sm:$0xff] %v1600
          %1617 = vst [vmem:[%s365 + $0x58] sm:$0xff] %v1601
          %1618 = vst [vmem:[%s365 + $0x60] sm:$0xff] %v1602
          %1619 = vst [vmem:[%s365 + $0x68] sm:$0xff] %v1603
          %1620 = vst [vmem:[%s365 + $0x70] sm:$0xff] %v1604
          %1621 = vst [vmem:[%s365 + $0x78] sm:$0xff] %v1605
        $region64: #{tpu_custom_call.1} parent=43 // pred_fallthru
          _
        %s1622 = sand.u32 %s192, 1
        %s1623 = scalar_lea.sflag [#allocation7], %s1622
        %s1624 = sand.u32 %s192, 1
        %s1625 = smul.addr %s1624, 128
        %s1626 = scalar_lea.vmem [#allocation11], %s1625
        // Predicated region
        $region65: #{tpu_custom_call.1} parent=43 // pred_check
          %p1627 = pneg %p202
        $region66: #{tpu_custom_call.1} parent=43 // pred_check_branch
          %1629 = sbr.rel (%p1627) target = $region68
        $region67: #{tpu_custom_call.1} parent=43 // pred_region
          %s1631 = ssub.s32 2048, 2048
          %1632 = vsyncadd %s1623, %s1631
          %s1633 = smul.addr %s30, 16
          %s1634 = smul.addr %s1633, 128
          %s1635 = scalar_lea.hbm %s6, %s1634
          %s1636 = sshll.u32 %s1626, 4
          %s1637 = int_to_ptr.vmem [resolvable:$true] %s1636
          %1642 = dma.vmem_to_hbm [thread:$0]  %s1637, 2048, %s1635, %s1623, 256, 256, 16
        $region68: #{tpu_custom_call.1} parent=43 // pred_fallthru
          _
      $region44: #{tpu_custom_call.1} parent=5 // pred_fallthru
        _
      %p1643 = scmp.le.s32.totalorder 2, %s21
      // Predicated region
      $region69: #{tpu_custom_call.1} parent=5 // pred_check
        %p1644 = pneg %p1643
      $region70: #{tpu_custom_call.1} parent=5 // pred_check_branch
        %1646 = sbr.rel (%p1644) target = $region72
      $region71: #{tpu_custom_call.1} parent=5 // pred_region
        %s1647 = ssub.s32 %s21, 2
        // Predicated region
        $region73: #{tpu_custom_call.1} parent=71 // pred_check
          %p1648 = pneg %p208
        $region74: #{tpu_custom_call.1} parent=71 // pred_check_branch
          %1650 = sbr.rel (%p1648) target = $region76
        $region75: #{tpu_custom_call.1} parent=71 // pred_region
          %s1651 = sand.u32 %s193, 1
          %s1652 = scalar_lea.sflag [#allocation7], %s1651
          %s1653 = sand.u32 %s193, 1
          %s1654 = smul.addr %s1653, 128
          %s1655 = scalar_lea.vmem [#allocation11], %s1654
          %1656 = dma.done %s1652, 2048
        $region76: #{tpu_custom_call.1} parent=71 // pred_fallthru
          _
      $region72: #{tpu_custom_call.1} parent=5 // pred_fallthru
        _
    $region6: #{tpu_custom_call.1} parent=1 // loop_footer
      %s25 = sadd.s32 1, %s21
    $region7: #{tpu_custom_call.1} parent=1 // loop_footer_branch
      %20 = sbr.rel target = $region3
    $region8: #{tpu_custom_call.1} parent=1 // loop_exit
      _
    %1657 = vsyncpa [#allocation6], 1
    %s1658 = scalar_lea.sflag [#allocation6], 1
    %1659 = vsyncpa %s1658, 1
    %1660 = vsyncpa [#allocation9], 1
    %s1661 = scalar_lea.sflag [#allocation9], 1
    %1662 = vsyncpa %s1661, 1
    %1663 = vsyncpa [#allocation7], 1
    %s1664 = scalar_lea.sflag [#allocation7], 1
    %1665 = vsyncpa %s1664, 1

</llo_original>
